<compile_context>
chip_gen: v7x
topology: tpu7x:2x2x1
jax: 0.10.0
libtpu: 0.0.40
codegen_flags: <defaults>
</compile_context>

<pallas_src>
import math

import jax
import jax.numpy as jnp
import numpy as np
from jax import lax
from jax.experimental import pallas as pl
from jax.experimental.pallas import tpu as pltpu  # noqa: F401  (imported per convention)

# ---- small, module-consistent config -------------------------------------
VOCAB = 64
EMBED = 32
HEADS = 4
LAYERS = 2
MAX_SEQ = 16
HEAD_DIM = EMBED // HEADS
FF = EMBED * 4            # dim_feedforward = embed_dim * 4
LN_EPS = 1e-5
VOCAB_PAD = 128           # lane-dense output (VOCAB zero-padded 64 -> 128)
QKV_PAD = 128             # lane-dense fused QKV (3*EMBED = 96 zero-padded -> 128)
NVEC = 16                 # rows in the per-layer packed vector slab (11 used, padded to 16)


# ---- in-kernel helpers -----------------------------------------------------
def _layernorm(x, g, b, eps=LN_EPS):
    mu = jnp.mean(x, axis=-1, keepdims=True)
    xc = x - mu
    var = jnp.mean(xc * xc, axis=-1, keepdims=True)
    return xc * lax.rsqrt(var + eps) * g + b


def _bf16(x):
    return x.astype(jnp.bfloat16)


# ---- Pallas kernel: the entire forward pass (all layers + head) -------------
# vec_ref row layout (per layer, each row padded to 128 lanes):
#   0: qkv bias (q pre-scaled) (96+pad) | 1: bo (32) | 2: cross const out_proj(value_bias)
#   3: b1 (128) | 4: b2 (32) | 5: ln1g | 6: ln1b | 7: ln2g | 8: ln2b | 9: ln3g | 10: ln3b
# fvec_ref rows: 0: ln_f gamma (32) | 1: ln_f beta (32) | 2: fc_out bias (padded to 128)
# amask_ref : (BT, H*BT)  additive causal/block-batch mask, tiled once per head
# blk_ref   : (H*BT, D)   0/1 mask selecting head h's HEAD_DIM columns in row-block h
# gsum_ref  : (H*BT, H*BT) 0/1 group-sum matrix (segmented softmax denominator via MXU)
def fused_forward_kernel(h_ref, amask_ref, blk_ref, gsum_ref,
                         wqkv_ref, wo_ref, w1_ref, w2_ref,
                         vec_ref, wout_ref, fvec_ref, out_ref):
    x = h_ref[...]                      # (BT, D) f32, resident for the whole forward
    amask = amask_ref[...]              # (BT, H*BT)
    blk = blk_ref[...]                  # (H*BT, D)
    gsum = gsum_ref[...]                # (H*BT, H*BT)

    for l in range(LAYERS):             # static unroll over layers
        # ---- masked multi-head self-attention ------------------------------
        # One fused, lane-dense QKV matmul (softmax scale already folded into Wq/bq).
        qkv = jnp.dot(_bf16(x), wqkv_ref[l],
                      preferred_element_type=jnp.float32) + vec_ref[l, 0:1, :]
        q = qkv[:, 0:EMBED]
        k = qkv[:, EMBED:2 * EMBED]
        v = qkv[:, 2 * EMBED:3 * EMBED]

        # Block-diagonal K / V: row block h keeps only head h's HEAD_DIM columns.
        k_blk = jnp.concatenate([k] * HEADS, axis=0) * blk      # (H*BT, D)
        v_blk = jnp.concatenate([v] * HEADS, axis=0) * blk      # (H*BT, D)

        # All-head scores in one dot: column block h == Q_h @ K_h^T.
        s = lax.dot_general(_bf16(q), _bf16(k_blk), (((1,), (1,)), ((), ())),
                            preferred_element_type=jnp.float32) + amask

        # Single softmax chain for all heads.  Row-global max is an exact stabilizer
        # for each per-head group (softmax shift invariance); safe here because
        # unmasked scores are O(1) across heads.
        s = s - jnp.max(s, axis=-1, keepdims=True)
        p = jnp.exp(s)
        denom = jnp.dot(p, gsum, preferred_element_type=jnp.float32)  # per-group sums
        p = p * pl.reciprocal(denom, approx=True)

        # All-head context, already lane-concatenated, then one Wo matmul.
        ctx = jnp.dot(_bf16(p), _bf16(v_blk), preferred_element_type=jnp.float32)
        attn = jnp.dot(_bf16(ctx), wo_ref[l],
                       preferred_element_type=jnp.float32) + vec_ref[l, 1:2, 0:EMBED]
        x = _layernorm(x + attn, vec_ref[l, 5:6, 0:EMBED], vec_ref[l, 6:7, 0:EMBED])

        # ---- cross-attention over the module's all-zero memory: constant ----
        x = _layernorm(x + vec_ref[l, 2:3, 0:EMBED],
                       vec_ref[l, 7:8, 0:EMBED], vec_ref[l, 8:9, 0:EMBED])

        # ---- feed forward: relu(x @ W1 + b1) @ W2 + b2 (lane-dense hidden) ----
        hdn = jnp.maximum(
            jnp.dot(_bf16(x), w1_ref[l], preferred_element_type=jnp.float32)
            + vec_ref[l, 3:4, 0:FF], 0.0)
        ff = jnp.dot(_bf16(hdn), w2_ref[l],
                     preferred_element_type=jnp.float32) + vec_ref[l, 4:5, 0:EMBED]
        x = _layernorm(x + ff, vec_ref[l, 9:10, 0:EMBED], vec_ref[l, 10:11, 0:EMBED])

    # ---- final LayerNorm + lane-dense vocab projection (padded to 128 lanes) ----
    x = _layernorm(x, fvec_ref[0:1, 0:EMBED], fvec_ref[1:2, 0:EMBED])
    out_ref[...] = jnp.dot(_bf16(x), wout_ref[...],
                           preferred_element_type=jnp.float32) + fvec_ref[2:3, :]


# ---- parameter packing (runs ONCE, in the factory) ----------------------------
def pack_params(P):
    D, hd = EMBED, HEAD_DIM
    scale = 1.0 / math.sqrt(hd)

    wqkv_list, wo_list, w1_list, w2_list, vec_rows = [], [], [], [], []
    for lp in P["layers"]:
        # Fold the softmax scale into Wq / bq (exact); pad QKV to 128 lanes.
        wqkv96 = jnp.concatenate([lp["wq"] * scale, lp["wk"], lp["wv"]], axis=1)
        wqkv_list.append(jnp.zeros((D, QKV_PAD), jnp.float32).at[:, :3 * D].set(wqkv96))
        wo_list.append(lp["wo"])
        w1_list.append(lp["w1"])
        w2_list.append(lp["w2"])

        # Cross-attention over all-zeros memory collapses to out_proj(value_bias).
        cross = lp["xbv"] @ lp["xwo"] + lp["xbo"]
        rows = jnp.zeros((NVEC, 128), jnp.float32)
        rows = rows.at[0, 0:D].set(lp["bq"] * scale)
        rows = rows.at[0, D:2 * D].set(lp["bk"])
        rows = rows.at[0, 2 * D:3 * D].set(lp["bv"])
        rows = rows.at[1, :D].set(lp["bo"])
        rows = rows.at[2, :D].set(cross)
        rows = rows.at[3, :FF].set(lp["b1"])
        rows = rows.at[4, :D].set(lp["b2"])
        rows = rows.at[5, :D].set(lp["ln1g"])
        rows = rows.at[6, :D].set(lp["ln1b"])
        rows = rows.at[7, :D].set(lp["ln2g"])
        rows = rows.at[8, :D].set(lp["ln2b"])
        rows = rows.at[9, :D].set(lp["ln3g"])
        rows = rows.at[10, :D].set(lp["ln3b"])
        vec_rows.append(rows)

    wout = jnp.zeros((D, VOCAB_PAD), jnp.float32).at[:, :VOCAB].set(P["wout"])
    fvec = jnp.zeros((8, VOCAB_PAD), jnp.float32)
    fvec = fvec.at[0, :D].set(P["lnfg"]).at[1, :D].set(P["lnfb"])
    fvec = fvec.at[2, :VOCAB].set(P["bout"])

    return dict(
        wqkv=jnp.stack(wqkv_list).astype(jnp.bfloat16),   # (L, D, 128)
        wo=jnp.stack(wo_list).astype(jnp.bfloat16),       # (L, D, D)
        w1=jnp.stack(w1_list).astype(jnp.bfloat16),       # (L, D, FF)
        w2=jnp.stack(w2_list).astype(jnp.bfloat16),       # (L, FF, D)
        vec=jnp.stack(vec_rows),                          # (L, NVEC, 128) f32
        wout=wout.astype(jnp.bfloat16),
        fvec=fvec,
    )


# ---- attention constants (runs ONCE, in the factory) ---------------------------
def build_attention_consts(B, T):
    bt = B * T
    idx = jnp.arange(bt)
    row_b, col_b = idx[:, None] // T, idx[None, :] // T
    row_t, col_t = idx[:, None] % T, idx[None, :] % T
    ok = (row_b == col_b) & (col_t <= row_t)
    base = jnp.where(ok, jnp.float32(0.0), jnp.float32(-1e30))      # (bt, bt)
    amask = jnp.tile(base, (1, HEADS))                               # (bt, H*bt)

    r = jnp.arange(HEADS * bt)
    c = jnp.arange(EMBED)
    blk = ((r[:, None] // bt) == (c[None, :] // HEAD_DIM)).astype(jnp.float32)   # (H*bt, D)
    gsum = ((r[:, None] // bt) == (r[None, :] // bt)).astype(jnp.float32)        # (H*bt, H*bt)
    return amask, blk, gsum


# ---- forward factory: pack once, jit once, reuse every call ---------------------
def make_pallas_forward(P, B, T):
    packed = pack_params(P)
    amask, blk, gsum = build_attention_consts(B, T)
    tok_emb = P["token_emb"]
    pos_emb = P["pos_emb"][:T]
    bt = B * T

    # Gridless single-block call: total resident footprint << VMEM on v5e/v6e/v7x;
    # adding a grid at this size is pure per-step overhead.
    kernel_call = pl.pallas_call(
        fused_forward_kernel,
        out_shape=jax.ShapeDtypeStruct((bt, VOCAB_PAD), jnp.float32),
    )

    @jax.jit
    def forward(tokens):
        # Embedding gather + positional add: plain-JAX glue, fused under the same jit.
        # nn.Dropout is the identity at inference time.
        h = jnp.take(tok_emb, tokens, axis=0) + pos_emb[None]
        h2 = h.reshape(bt, EMBED).astype(jnp.float32)
        out = kernel_call(h2, amask, blk, gsum,
                          packed["wqkv"], packed["wo"], packed["w1"], packed["w2"],
                          packed["vec"], packed["wout"], packed["fvec"])
        return out[:, :VOCAB].reshape(B, T, VOCAB)

    return forward


# ---- deterministic parameter init (shapes from the module's __init__) --------
def init_params(key):
    keys = iter(jax.random.split(key, 64))

    def nrm(shape, s=0.05):
        return jax.random.normal(next(keys), shape, jnp.float32) * s

    def ln_pair():
        return 1.0 + nrm((EMBED,), 0.02), nrm((EMBED,), 0.02)

    P = {
        "token_emb": nrm((VOCAB, EMBED), 0.1),
        "pos_emb": nrm((MAX_SEQ, EMBED), 0.1),
        "layers": [],
    }
    for _ in range(LAYERS):
        ln1g, ln1b = ln_pair()
        ln2g, ln2b = ln_pair()
        ln3g, ln3b = ln_pair()
        lp = dict(
            wq=nrm((EMBED, EMBED)), bq=nrm((EMBED,)),
            wk=nrm((EMBED, EMBED)), bk=nrm((EMBED,)),
            wv=nrm((EMBED, EMBED)), bv=nrm((EMBED,)),
            wo=nrm((EMBED, EMBED)), bo=nrm((EMBED,)),
            ln1g=ln1g, ln1b=ln1b,
            # cross-attention over all-zeros memory only depends on its value
            # in_proj bias and the output projection (q/k/v weights hit zeros).
            xbv=nrm((EMBED,)), xwo=nrm((EMBED, EMBED)), xbo=nrm((EMBED,)),
            ln2g=ln2g, ln2b=ln2b,
            w1=nrm((EMBED, FF)), b1=nrm((FF,)),
            w2=nrm((FF, EMBED)), b2=nrm((EMBED,)),
            ln3g=ln3g, ln3b=ln3b,
        )
        P["layers"].append(lp)
    P["lnfg"], P["lnfb"] = ln_pair()
    P["wout"] = nrm((EMBED, VOCAB))
    P["bout"] = nrm((VOCAB,))
    return P


# ---- pure-JAX reference (same math, f32, no Pallas) ---------------------------
def _ref_ln(x, g, b, eps=LN_EPS):
    mu = jnp.mean(x, axis=-1, keepdims=True)
    var = jnp.mean((x - mu) ** 2, axis=-1, keepdims=True)
    return (x - mu) / jnp.sqrt(var + eps) * g + b


def reference_forward(tokens, P):
    B, T = tokens.shape
    h = P["token_emb"][tokens] + P["pos_emb"][:T][None]
    row = jnp.arange(T)[:, None]
    col = jnp.arange(T)[None, :]
    bias = jnp.where(col > row, jnp.float32(-1e30), jnp.float32(0.0))
    for lp in P["layers"]:
        q = h @ lp["wq"] + lp["bq"]
        k = h @ lp["wk"] + lp["bk"]
        v = h @ lp["wv"] + lp["bv"]

        def split(a):
            return a.reshape(B, T, HEADS, HEAD_DIM).transpose(0, 2, 1, 3)

        qh, kh, vh = split(q), split(k), split(v)
        s = jnp.einsum("bhqd,bhkd->bhqk", qh, kh) / math.sqrt(HEAD_DIM) + bias
        p = jax.nn.softmax(s, axis=-1)
        o = jnp.einsum("bhqk,bhkd->bhqd", p, vh)
        o = o.transpose(0, 2, 1, 3).reshape(B, T, EMBED)
        o = o @ lp["wo"] + lp["bo"]
        h = _ref_ln(h + o, lp["ln1g"], lp["ln1b"])
        cross = lp["xbv"] @ lp["xwo"] + lp["xbo"]
        h = _ref_ln(h + cross, lp["ln2g"], lp["ln2b"])
        ff = jax.nn.relu(h @ lp["w1"] + lp["b1"]) @ lp["w2"] + lp["b2"]
        h = _ref_ln(h + ff, lp["ln3g"], lp["ln3b"])
    h = _ref_ln(h, P["lnfg"], P["lnfb"])
    return h @ P["wout"] + P["bout"]


if __name__ == "__main__":
    key = jax.random.PRNGKey(0)
    kp, kx = jax.random.split(key)
    P = init_params(kp)

    B, T = 2, 8
    tokens = jax.random.randint(kx, (B, T), 0, VOCAB, dtype=jnp.int32)

    # Build once (packing + constants + jit compile happen here, not per call).
    forward = make_pallas_forward(P, B, T)

    logits = jax.block_until_ready(forward(tokens))
    assert logits.shape == (B, T, VOCAB)
    # Second call exercises the cached/jitted fast path.
    logits = jax.block_until_ready(forward(tokens))

    # f32 reference; the kernel uses bf16 MXU operands with f32 accumulation and an
    # approx reciprocal, so allow a slightly looser (but still tight) tolerance.
    ref = reference_forward(tokens, P)
    np.testing.assert_allclose(np.asarray(logits), np.asarray(ref),
                               atol=2e-2, rtol=2e-2)
    print("KERNEL_OK")
</pallas_src>

<mosaic_0001>
module attributes {stable_mosaic.version = 11 : i64} {
  func.func @fused_forward_kernel(%arg0: memref<16x32xf32, #tpu.memory_space<vmem>>, %arg1: memref<16x64xf32, #tpu.memory_space<vmem>>, %arg2: memref<64x32xf32, #tpu.memory_space<vmem>>, %arg3: memref<64x64xf32, #tpu.memory_space<vmem>>, %arg4: memref<2x32x128xbf16, #tpu.memory_space<vmem>>, %arg5: memref<2x32x32xbf16, #tpu.memory_space<vmem>>, %arg6: memref<2x32x128xbf16, #tpu.memory_space<vmem>>, %arg7: memref<2x128x32xbf16, #tpu.memory_space<vmem>>, %arg8: memref<2x16x128xf32, #tpu.memory_space<vmem>>, %arg9: memref<32x128xbf16, #tpu.memory_space<vmem>>, %arg10: memref<8x128xf32, #tpu.memory_space<vmem>>, %arg11: memref<16x128xf32, #tpu.memory_space<vmem>>) attributes {dimension_semantics = [], scalar_prefetch = 0 : i64, scratch_operands = 0 : i64, tpu.core_type = #tpu.core_type<tc>} {
    %c0 = arith.constant 0 : index
    %c0_0 = arith.constant 0 : index
    %0 = vector.load %arg0[%c0, %c0_0] : memref<16x32xf32, #tpu.memory_space<vmem>>, vector<16x32xf32>
    %c0_1 = arith.constant 0 : index
    %c0_2 = arith.constant 0 : index
    %1 = vector.load %arg1[%c0_1, %c0_2] : memref<16x64xf32, #tpu.memory_space<vmem>>, vector<16x64xf32>
    %c0_3 = arith.constant 0 : index
    %c0_4 = arith.constant 0 : index
    %2 = vector.load %arg2[%c0_3, %c0_4] : memref<64x32xf32, #tpu.memory_space<vmem>>, vector<64x32xf32>
    %c0_5 = arith.constant 0 : index
    %c0_6 = arith.constant 0 : index
    %3 = vector.load %arg3[%c0_5, %c0_6] : memref<64x64xf32, #tpu.memory_space<vmem>>, vector<64x64xf32>
    %4 = arith.truncf %0 : vector<16x32xf32> to vector<16x32xbf16>
    %c0_7 = arith.constant 0 : index
    %c0_8 = arith.constant 0 : index
    %c0_9 = arith.constant 0 : index
    %5 = vector.load %arg4[%c0_7, %c0_8, %c0_9] : memref<2x32x128xbf16, #tpu.memory_space<vmem>>, vector<1x32x128xbf16>
    %6 = vector.shape_cast %5 : vector<1x32x128xbf16> to vector<32x128xbf16>
    %cst = arith.constant dense<0.000000e+00> : vector<16x128xf32>
    %7 = tpu.matmul %4, %6, %cst {dimension_numbers = #tpu.dot_dimension_numbers<[1], [0], [0], [1], [0, 0, 1, 1], [], []>} : vector<16x32xbf16>, vector<32x128xbf16>, vector<16x128xf32> -> vector<16x128xf32>
    %c0_10 = arith.constant 0 : index
    %c0_11 = arith.constant 0 : index
    %c0_12 = arith.constant 0 : index
    %8 = vector.load %arg8[%c0_10, %c0_11, %c0_12] : memref<2x16x128xf32, #tpu.memory_space<vmem>>, vector<1x1x128xf32>
    %9 = vector.shape_cast %8 : vector<1x1x128xf32> to vector<1x128xf32>
    %10 = vector.broadcast %9 : vector<1x128xf32> to vector<16x128xf32>
    %11 = arith.addf %7, %10 : vector<16x128xf32>
    %12 = vector.extract_strided_slice %11 {offsets = [0, 0], sizes = [16, 32], strides = [1, 1]} : vector<16x128xf32> to vector<16x32xf32>
    %13 = vector.extract_strided_slice %11 {offsets = [0, 32], sizes = [16, 32], strides = [1, 1]} : vector<16x128xf32> to vector<16x32xf32>
    %14 = vector.extract_strided_slice %11 {offsets = [0, 64], sizes = [16, 32], strides = [1, 1]} : vector<16x128xf32> to vector<16x32xf32>
    %15 = tpu.concatenate %13, %13, %13, %13 in 0 : vector<16x32xf32>, vector<16x32xf32>, vector<16x32xf32>, vector<16x32xf32> -> vector<64x32xf32>
    %16 = arith.mulf %15, %2 : vector<64x32xf32>
    %17 = tpu.concatenate %14, %14, %14, %14 in 0 : vector<16x32xf32>, vector<16x32xf32>, vector<16x32xf32>, vector<16x32xf32> -> vector<64x32xf32>
    %18 = arith.mulf %17, %2 : vector<64x32xf32>
    %19 = arith.truncf %12 : vector<16x32xf32> to vector<16x32xbf16>
    %20 = arith.truncf %16 : vector<64x32xf32> to vector<64x32xbf16>
    %cst_13 = arith.constant dense<0.000000e+00> : vector<16x64xf32>
    %21 = tpu.matmul %19, %20, %cst_13 {dimension_numbers = #tpu.dot_dimension_numbers<[1], [1], [0], [0], [0, 0, 1, 0], [], []>} : vector<16x32xbf16>, vector<64x32xbf16>, vector<16x64xf32> -> vector<16x64xf32>
    %22 = arith.addf %21, %1 : vector<16x64xf32>
    %cst_14 = arith.constant dense<0xFF800000> : vector<16xf32>
    %23 = vector.multi_reduction <maximumf>, %22, %cst_14 [1] : vector<16x64xf32> to vector<16xf32>
    %24 = vector.shape_cast %23 : vector<16xf32> to vector<16x1xf32>
    %25 = vector.broadcast %24 : vector<16x1xf32> to vector<16x64xf32>
    %26 = arith.subf %22, %25 : vector<16x64xf32>
    %27 = math.exp %26 : vector<16x64xf32>
    %cst_15 = arith.constant dense<0.000000e+00> : vector<16x64xf32>
    %28 = tpu.matmul %27, %3, %cst_15 {dimension_numbers = #tpu.dot_dimension_numbers<[1], [0], [0], [1], [0, 0, 1, 1], [], []>} : vector<16x64xf32>, vector<64x64xf32>, vector<16x64xf32> -> vector<16x64xf32>
    %29 = tpu.reciprocal %28 {approx = true} : vector<16x64xf32> -> vector<16x64xf32>
    %30 = arith.mulf %27, %29 : vector<16x64xf32>
    %31 = arith.truncf %30 : vector<16x64xf32> to vector<16x64xbf16>
    %32 = arith.truncf %18 : vector<64x32xf32> to vector<64x32xbf16>
    %cst_16 = arith.constant dense<0.000000e+00> : vector<16x32xf32>
    %33 = tpu.matmul %31, %32, %cst_16 {dimension_numbers = #tpu.dot_dimension_numbers<[1], [0], [0], [1], [0, 0, 1, 1], [], []>} : vector<16x64xbf16>, vector<64x32xbf16>, vector<16x32xf32> -> vector<16x32xf32>
    %34 = arith.truncf %33 : vector<16x32xf32> to vector<16x32xbf16>
    %c0_17 = arith.constant 0 : index
    %c0_18 = arith.constant 0 : index
    %c0_19 = arith.constant 0 : index
    %35 = vector.load %arg5[%c0_17, %c0_18, %c0_19] : memref<2x32x32xbf16, #tpu.memory_space<vmem>>, vector<1x32x32xbf16>
    %36 = vector.shape_cast %35 : vector<1x32x32xbf16> to vector<32x32xbf16>
    %cst_20 = arith.constant dense<0.000000e+00> : vector<16x32xf32>
    %37 = tpu.matmul %34, %36, %cst_20 {dimension_numbers = #tpu.dot_dimension_numbers<[1], [0], [0], [1], [0, 0, 1, 1], [], []>} : vector<16x32xbf16>, vector<32x32xbf16>, vector<16x32xf32> -> vector<16x32xf32>
    %c0_21 = arith.constant 0 : index
    %c1 = arith.constant 1 : index
    %c0_22 = arith.constant 0 : index
    %38 = vector.load %arg8[%c0_21, %c1, %c0_22] : memref<2x16x128xf32, #tpu.memory_space<vmem>>, vector<1x1x32xf32>
    %39 = vector.shape_cast %38 : vector<1x1x32xf32> to vector<1x32xf32>
    %40 = vector.broadcast %39 : vector<1x32xf32> to vector<16x32xf32>
    %41 = arith.addf %37, %40 : vector<16x32xf32>
    %42 = arith.addf %0, %41 : vector<16x32xf32>
    %c0_23 = arith.constant 0 : index
    %c5 = arith.constant 5 : index
    %c0_24 = arith.constant 0 : index
    %43 = vector.load %arg8[%c0_23, %c5, %c0_24] : memref<2x16x128xf32, #tpu.memory_space<vmem>>, vector<1x1x32xf32>
    %44 = vector.shape_cast %43 : vector<1x1x32xf32> to vector<1x32xf32>
    %c0_25 = arith.constant 0 : index
    %c6 = arith.constant 6 : index
    %c0_26 = arith.constant 0 : index
    %45 = vector.load %arg8[%c0_25, %c6, %c0_26] : memref<2x16x128xf32, #tpu.memory_space<vmem>>, vector<1x1x32xf32>
    %46 = vector.shape_cast %45 : vector<1x1x32xf32> to vector<1x32xf32>
    %cst_27 = arith.constant dense<0.000000e+00> : vector<16xf32>
    %47 = vector.multi_reduction <add>, %42, %cst_27 [1] : vector<16x32xf32> to vector<16xf32>
    %48 = vector.shape_cast %47 : vector<16xf32> to vector<16x1xf32>
    %cst_28 = arith.constant 3.200000e+01 : f32
    %49 = vector.broadcast %cst_28 : f32 to vector<16x1xf32>
    %50 = arith.divf %48, %49 : vector<16x1xf32>
    %51 = vector.broadcast %50 : vector<16x1xf32> to vector<16x32xf32>
    %52 = arith.subf %42, %51 : vector<16x32xf32>
    %53 = arith.mulf %52, %52 : vector<16x32xf32>
    %cst_29 = arith.constant dense<0.000000e+00> : vector<16xf32>
    %54 = vector.multi_reduction <add>, %53, %cst_29 [1] : vector<16x32xf32> to vector<16xf32>
    %55 = vector.shape_cast %54 : vector<16xf32> to vector<16x1xf32>
    %cst_30 = arith.constant 3.200000e+01 : f32
    %56 = vector.broadcast %cst_30 : f32 to vector<16x1xf32>
    %57 = arith.divf %55, %56 : vector<16x1xf32>
    %cst_31 = arith.constant 9.99999974E-6 : f32
    %58 = vector.broadcast %cst_31 : f32 to vector<16x1xf32>
    %59 = arith.addf %57, %58 : vector<16x1xf32>
    %60 = math.rsqrt %59 : vector<16x1xf32>
    %61 = vector.broadcast %60 : vector<16x1xf32> to vector<16x32xf32>
    %62 = arith.mulf %52, %61 : vector<16x32xf32>
    %63 = vector.broadcast %44 : vector<1x32xf32> to vector<16x32xf32>
    %64 = arith.mulf %62, %63 : vector<16x32xf32>
    %65 = vector.broadcast %46 : vector<1x32xf32> to vector<16x32xf32>
    %66 = arith.addf %64, %65 : vector<16x32xf32>
    %c0_32 = arith.constant 0 : index
    %c2 = arith.constant 2 : index
    %c0_33 = arith.constant 0 : index
    %67 = vector.load %arg8[%c0_32, %c2, %c0_33] : memref<2x16x128xf32, #tpu.memory_space<vmem>>, vector<1x1x32xf32>
    %68 = vector.shape_cast %67 : vector<1x1x32xf32> to vector<1x32xf32>
    %69 = vector.broadcast %68 : vector<1x32xf32> to vector<16x32xf32>
    %70 = arith.addf %66, %69 : vector<16x32xf32>
    %c0_34 = arith.constant 0 : index
    %c7 = arith.constant 7 : index
    %c0_35 = arith.constant 0 : index
    %71 = vector.load %arg8[%c0_34, %c7, %c0_35] : memref<2x16x128xf32, #tpu.memory_space<vmem>>, vector<1x1x32xf32>
    %72 = vector.shape_cast %71 : vector<1x1x32xf32> to vector<1x32xf32>
    %c0_36 = arith.constant 0 : index
    %c8 = arith.constant 8 : index
    %c0_37 = arith.constant 0 : index
    %73 = vector.load %arg8[%c0_36, %c8, %c0_37] : memref<2x16x128xf32, #tpu.memory_space<vmem>>, vector<1x1x32xf32>
    %74 = vector.shape_cast %73 : vector<1x1x32xf32> to vector<1x32xf32>
    %cst_38 = arith.constant dense<0.000000e+00> : vector<16xf32>
    %75 = vector.multi_reduction <add>, %70, %cst_38 [1] : vector<16x32xf32> to vector<16xf32>
    %76 = vector.shape_cast %75 : vector<16xf32> to vector<16x1xf32>
    %cst_39 = arith.constant 3.200000e+01 : f32
    %77 = vector.broadcast %cst_39 : f32 to vector<16x1xf32>
    %78 = arith.divf %76, %77 : vector<16x1xf32>
    %79 = vector.broadcast %78 : vector<16x1xf32> to vector<16x32xf32>
    %80 = arith.subf %70, %79 : vector<16x32xf32>
    %81 = arith.mulf %80, %80 : vector<16x32xf32>
    %cst_40 = arith.constant dense<0.000000e+00> : vector<16xf32>
    %82 = vector.multi_reduction <add>, %81, %cst_40 [1] : vector<16x32xf32> to vector<16xf32>
    %83 = vector.shape_cast %82 : vector<16xf32> to vector<16x1xf32>
    %cst_41 = arith.constant 3.200000e+01 : f32
    %84 = vector.broadcast %cst_41 : f32 to vector<16x1xf32>
    %85 = arith.divf %83, %84 : vector<16x1xf32>
    %cst_42 = arith.constant 9.99999974E-6 : f32
    %86 = vector.broadcast %cst_42 : f32 to vector<16x1xf32>
    %87 = arith.addf %85, %86 : vector<16x1xf32>
    %88 = math.rsqrt %87 : vector<16x1xf32>
    %89 = vector.broadcast %88 : vector<16x1xf32> to vector<16x32xf32>
    %90 = arith.mulf %80, %89 : vector<16x32xf32>
    %91 = vector.broadcast %72 : vector<1x32xf32> to vector<16x32xf32>
    %92 = arith.mulf %90, %91 : vector<16x32xf32>
    %93 = vector.broadcast %74 : vector<1x32xf32> to vector<16x32xf32>
    %94 = arith.addf %92, %93 : vector<16x32xf32>
    %95 = arith.truncf %94 : vector<16x32xf32> to vector<16x32xbf16>
    %c0_43 = arith.constant 0 : index
    %c0_44 = arith.constant 0 : index
    %c0_45 = arith.constant 0 : index
    %96 = vector.load %arg6[%c0_43, %c0_44, %c0_45] : memref<2x32x128xbf16, #tpu.memory_space<vmem>>, vector<1x32x128xbf16>
    %97 = vector.shape_cast %96 : vector<1x32x128xbf16> to vector<32x128xbf16>
    %cst_46 = arith.constant dense<0.000000e+00> : vector<16x128xf32>
    %98 = tpu.matmul %95, %97, %cst_46 {dimension_numbers = #tpu.dot_dimension_numbers<[1], [0], [0], [1], [0, 0, 1, 1], [], []>} : vector<16x32xbf16>, vector<32x128xbf16>, vector<16x128xf32> -> vector<16x128xf32>
    %c0_47 = arith.constant 0 : index
    %c3 = arith.constant 3 : index
    %c0_48 = arith.constant 0 : index
    %99 = vector.load %arg8[%c0_47, %c3, %c0_48] : memref<2x16x128xf32, #tpu.memory_space<vmem>>, vector<1x1x128xf32>
    %100 = vector.shape_cast %99 : vector<1x1x128xf32> to vector<1x128xf32>
    %101 = vector.broadcast %100 : vector<1x128xf32> to vector<16x128xf32>
    %102 = arith.addf %98, %101 : vector<16x128xf32>
    %cst_49 = arith.constant 0.000000e+00 : f32
    %103 = vector.broadcast %cst_49 : f32 to vector<16x128xf32>
    %104 = arith.maximumf %102, %103 : vector<16x128xf32>
    %105 = arith.truncf %104 : vector<16x128xf32> to vector<16x128xbf16>
    %c0_50 = arith.constant 0 : index
    %c0_51 = arith.constant 0 : index
    %c0_52 = arith.constant 0 : index
    %106 = vector.load %arg7[%c0_50, %c0_51, %c0_52] : memref<2x128x32xbf16, #tpu.memory_space<vmem>>, vector<1x128x32xbf16>
    %107 = vector.shape_cast %106 : vector<1x128x32xbf16> to vector<128x32xbf16>
    %cst_53 = arith.constant dense<0.000000e+00> : vector<16x32xf32>
    %108 = tpu.matmul %105, %107, %cst_53 {dimension_numbers = #tpu.dot_dimension_numbers<[1], [0], [0], [1], [0, 0, 1, 1], [], []>} : vector<16x128xbf16>, vector<128x32xbf16>, vector<16x32xf32> -> vector<16x32xf32>
    %c0_54 = arith.constant 0 : index
    %c4 = arith.constant 4 : index
    %c0_55 = arith.constant 0 : index
    %109 = vector.load %arg8[%c0_54, %c4, %c0_55] : memref<2x16x128xf32, #tpu.memory_space<vmem>>, vector<1x1x32xf32>
    %110 = vector.shape_cast %109 : vector<1x1x32xf32> to vector<1x32xf32>
    %111 = vector.broadcast %110 : vector<1x32xf32> to vector<16x32xf32>
    %112 = arith.addf %108, %111 : vector<16x32xf32>
    %113 = arith.addf %94, %112 : vector<16x32xf32>
    %c0_56 = arith.constant 0 : index
    %c9 = arith.constant 9 : index
    %c0_57 = arith.constant 0 : index
    %114 = vector.load %arg8[%c0_56, %c9, %c0_57] : memref<2x16x128xf32, #tpu.memory_space<vmem>>, vector<1x1x32xf32>
    %115 = vector.shape_cast %114 : vector<1x1x32xf32> to vector<1x32xf32>
    %c0_58 = arith.constant 0 : index
    %c10 = arith.constant 10 : index
    %c0_59 = arith.constant 0 : index
    %116 = vector.load %arg8[%c0_58, %c10, %c0_59] : memref<2x16x128xf32, #tpu.memory_space<vmem>>, vector<1x1x32xf32>
    %117 = vector.shape_cast %116 : vector<1x1x32xf32> to vector<1x32xf32>
    %cst_60 = arith.constant dense<0.000000e+00> : vector<16xf32>
    %118 = vector.multi_reduction <add>, %113, %cst_60 [1] : vector<16x32xf32> to vector<16xf32>
    %119 = vector.shape_cast %118 : vector<16xf32> to vector<16x1xf32>
    %cst_61 = arith.constant 3.200000e+01 : f32
    %120 = vector.broadcast %cst_61 : f32 to vector<16x1xf32>
    %121 = arith.divf %119, %120 : vector<16x1xf32>
    %122 = vector.broadcast %121 : vector<16x1xf32> to vector<16x32xf32>
    %123 = arith.subf %113, %122 : vector<16x32xf32>
    %124 = arith.mulf %123, %123 : vector<16x32xf32>
    %cst_62 = arith.constant dense<0.000000e+00> : vector<16xf32>
    %125 = vector.multi_reduction <add>, %124, %cst_62 [1] : vector<16x32xf32> to vector<16xf32>
    %126 = vector.shape_cast %125 : vector<16xf32> to vector<16x1xf32>
    %cst_63 = arith.constant 3.200000e+01 : f32
    %127 = vector.broadcast %cst_63 : f32 to vector<16x1xf32>
    %128 = arith.divf %126, %127 : vector<16x1xf32>
    %cst_64 = arith.constant 9.99999974E-6 : f32
    %129 = vector.broadcast %cst_64 : f32 to vector<16x1xf32>
    %130 = arith.addf %128, %129 : vector<16x1xf32>
    %131 = math.rsqrt %130 : vector<16x1xf32>
    %132 = vector.broadcast %131 : vector<16x1xf32> to vector<16x32xf32>
    %133 = arith.mulf %123, %132 : vector<16x32xf32>
    %134 = vector.broadcast %115 : vector<1x32xf32> to vector<16x32xf32>
    %135 = arith.mulf %133, %134 : vector<16x32xf32>
    %136 = vector.broadcast %117 : vector<1x32xf32> to vector<16x32xf32>
    %137 = arith.addf %135, %136 : vector<16x32xf32>
    %138 = arith.truncf %137 : vector<16x32xf32> to vector<16x32xbf16>
    %c1_65 = arith.constant 1 : index
    %c0_66 = arith.constant 0 : index
    %c0_67 = arith.constant 0 : index
    %139 = vector.load %arg4[%c1_65, %c0_66, %c0_67] : memref<2x32x128xbf16, #tpu.memory_space<vmem>>, vector<1x32x128xbf16>
    %140 = vector.shape_cast %139 : vector<1x32x128xbf16> to vector<32x128xbf16>
    %cst_68 = arith.constant dense<0.000000e+00> : vector<16x128xf32>
    %141 = tpu.matmul %138, %140, %cst_68 {dimension_numbers = #tpu.dot_dimension_numbers<[1], [0], [0], [1], [0, 0, 1, 1], [], []>} : vector<16x32xbf16>, vector<32x128xbf16>, vector<16x128xf32> -> vector<16x128xf32>
    %c1_69 = arith.constant 1 : index
    %c0_70 = arith.constant 0 : index
    %c0_71 = arith.constant 0 : index
    %142 = vector.load %arg8[%c1_69, %c0_70, %c0_71] : memref<2x16x128xf32, #tpu.memory_space<vmem>>, vector<1x1x128xf32>
    %143 = vector.shape_cast %142 : vector<1x1x128xf32> to vector<1x128xf32>
    %144 = vector.broadcast %143 : vector<1x128xf32> to vector<16x128xf32>
    %145 = arith.addf %141, %144 : vector<16x128xf32>
    %146 = vector.extract_strided_slice %145 {offsets = [0, 0], sizes = [16, 32], strides = [1, 1]} : vector<16x128xf32> to vector<16x32xf32>
    %147 = vector.extract_strided_slice %145 {offsets = [0, 32], sizes = [16, 32], strides = [1, 1]} : vector<16x128xf32> to vector<16x32xf32>
    %148 = vector.extract_strided_slice %145 {offsets = [0, 64], sizes = [16, 32], strides = [1, 1]} : vector<16x128xf32> to vector<16x32xf32>
    %149 = tpu.concatenate %147, %147, %147, %147 in 0 : vector<16x32xf32>, vector<16x32xf32>, vector<16x32xf32>, vector<16x32xf32> -> vector<64x32xf32>
    %150 = arith.mulf %149, %2 : vector<64x32xf32>
    %151 = tpu.concatenate %148, %148, %148, %148 in 0 : vector<16x32xf32>, vector<16x32xf32>, vector<16x32xf32>, vector<16x32xf32> -> vector<64x32xf32>
    %152 = arith.mulf %151, %2 : vector<64x32xf32>
    %153 = arith.truncf %146 : vector<16x32xf32> to vector<16x32xbf16>
    %154 = arith.truncf %150 : vector<64x32xf32> to vector<64x32xbf16>
    %cst_72 = arith.constant dense<0.000000e+00> : vector<16x64xf32>
    %155 = tpu.matmul %153, %154, %cst_72 {dimension_numbers = #tpu.dot_dimension_numbers<[1], [1], [0], [0], [0, 0, 1, 0], [], []>} : vector<16x32xbf16>, vector<64x32xbf16>, vector<16x64xf32> -> vector<16x64xf32>
    %156 = arith.addf %155, %1 : vector<16x64xf32>
    %cst_73 = arith.constant dense<0xFF800000> : vector<16xf32>
    %157 = vector.multi_reduction <maximumf>, %156, %cst_73 [1] : vector<16x64xf32> to vector<16xf32>
    %158 = vector.shape_cast %157 : vector<16xf32> to vector<16x1xf32>
    %159 = vector.broadcast %158 : vector<16x1xf32> to vector<16x64xf32>
    %160 = arith.subf %156, %159 : vector<16x64xf32>
    %161 = math.exp %160 : vector<16x64xf32>
    %cst_74 = arith.constant dense<0.000000e+00> : vector<16x64xf32>
    %162 = tpu.matmul %161, %3, %cst_74 {dimension_numbers = #tpu.dot_dimension_numbers<[1], [0], [0], [1], [0, 0, 1, 1], [], []>} : vector<16x64xf32>, vector<64x64xf32>, vector<16x64xf32> -> vector<16x64xf32>
    %163 = tpu.reciprocal %162 {approx = true} : vector<16x64xf32> -> vector<16x64xf32>
    %164 = arith.mulf %161, %163 : vector<16x64xf32>
    %165 = arith.truncf %164 : vector<16x64xf32> to vector<16x64xbf16>
    %166 = arith.truncf %152 : vector<64x32xf32> to vector<64x32xbf16>
    %cst_75 = arith.constant dense<0.000000e+00> : vector<16x32xf32>
    %167 = tpu.matmul %165, %166, %cst_75 {dimension_numbers = #tpu.dot_dimension_numbers<[1], [0], [0], [1], [0, 0, 1, 1], [], []>} : vector<16x64xbf16>, vector<64x32xbf16>, vector<16x32xf32> -> vector<16x32xf32>
    %168 = arith.truncf %167 : vector<16x32xf32> to vector<16x32xbf16>
    %c1_76 = arith.constant 1 : index
    %c0_77 = arith.constant 0 : index
    %c0_78 = arith.constant 0 : index
    %169 = vector.load %arg5[%c1_76, %c0_77, %c0_78] : memref<2x32x32xbf16, #tpu.memory_space<vmem>>, vector<1x32x32xbf16>
    %170 = vector.shape_cast %169 : vector<1x32x32xbf16> to vector<32x32xbf16>
    %cst_79 = arith.constant dense<0.000000e+00> : vector<16x32xf32>
    %171 = tpu.matmul %168, %170, %cst_79 {dimension_numbers = #tpu.dot_dimension_numbers<[1], [0], [0], [1], [0, 0, 1, 1], [], []>} : vector<16x32xbf16>, vector<32x32xbf16>, vector<16x32xf32> -> vector<16x32xf32>
    %c1_80 = arith.constant 1 : index
    %c1_81 = arith.constant 1 : index
    %c0_82 = arith.constant 0 : index
    %172 = vector.load %arg8[%c1_80, %c1_81, %c0_82] : memref<2x16x128xf32, #tpu.memory_space<vmem>>, vector<1x1x32xf32>
    %173 = vector.shape_cast %172 : vector<1x1x32xf32> to vector<1x32xf32>
    %174 = vector.broadcast %173 : vector<1x32xf32> to vector<16x32xf32>
    %175 = arith.addf %171, %174 : vector<16x32xf32>
    %176 = arith.addf %137, %175 : vector<16x32xf32>
    %c1_83 = arith.constant 1 : index
    %c5_84 = arith.constant 5 : index
    %c0_85 = arith.constant 0 : index
    %177 = vector.load %arg8[%c1_83, %c5_84, %c0_85] : memref<2x16x128xf32, #tpu.memory_space<vmem>>, vector<1x1x32xf32>
    %178 = vector.shape_cast %177 : vector<1x1x32xf32> to vector<1x32xf32>
    %c1_86 = arith.constant 1 : index
    %c6_87 = arith.constant 6 : index
    %c0_88 = arith.constant 0 : index
    %179 = vector.load %arg8[%c1_86, %c6_87, %c0_88] : memref<2x16x128xf32, #tpu.memory_space<vmem>>, vector<1x1x32xf32>
    %180 = vector.shape_cast %179 : vector<1x1x32xf32> to vector<1x32xf32>
    %cst_89 = arith.constant dense<0.000000e+00> : vector<16xf32>
    %181 = vector.multi_reduction <add>, %176, %cst_89 [1] : vector<16x32xf32> to vector<16xf32>
    %182 = vector.shape_cast %181 : vector<16xf32> to vector<16x1xf32>
    %cst_90 = arith.constant 3.200000e+01 : f32
    %183 = vector.broadcast %cst_90 : f32 to vector<16x1xf32>
    %184 = arith.divf %182, %183 : vector<16x1xf32>
    %185 = vector.broadcast %184 : vector<16x1xf32> to vector<16x32xf32>
    %186 = arith.subf %176, %185 : vector<16x32xf32>
    %187 = arith.mulf %186, %186 : vector<16x32xf32>
    %cst_91 = arith.constant dense<0.000000e+00> : vector<16xf32>
    %188 = vector.multi_reduction <add>, %187, %cst_91 [1] : vector<16x32xf32> to vector<16xf32>
    %189 = vector.shape_cast %188 : vector<16xf32> to vector<16x1xf32>
    %cst_92 = arith.constant 3.200000e+01 : f32
    %190 = vector.broadcast %cst_92 : f32 to vector<16x1xf32>
    %191 = arith.divf %189, %190 : vector<16x1xf32>
    %cst_93 = arith.constant 9.99999974E-6 : f32
    %192 = vector.broadcast %cst_93 : f32 to vector<16x1xf32>
    %193 = arith.addf %191, %192 : vector<16x1xf32>
    %194 = math.rsqrt %193 : vector<16x1xf32>
    %195 = vector.broadcast %194 : vector<16x1xf32> to vector<16x32xf32>
    %196 = arith.mulf %186, %195 : vector<16x32xf32>
    %197 = vector.broadcast %178 : vector<1x32xf32> to vector<16x32xf32>
    %198 = arith.mulf %196, %197 : vector<16x32xf32>
    %199 = vector.broadcast %180 : vector<1x32xf32> to vector<16x32xf32>
    %200 = arith.addf %198, %199 : vector<16x32xf32>
    %c1_94 = arith.constant 1 : index
    %c2_95 = arith.constant 2 : index
    %c0_96 = arith.constant 0 : index
    %201 = vector.load %arg8[%c1_94, %c2_95, %c0_96] : memref<2x16x128xf32, #tpu.memory_space<vmem>>, vector<1x1x32xf32>
    %202 = vector.shape_cast %201 : vector<1x1x32xf32> to vector<1x32xf32>
    %203 = vector.broadcast %202 : vector<1x32xf32> to vector<16x32xf32>
    %204 = arith.addf %200, %203 : vector<16x32xf32>
    %c1_97 = arith.constant 1 : index
    %c7_98 = arith.constant 7 : index
    %c0_99 = arith.constant 0 : index
    %205 = vector.load %arg8[%c1_97, %c7_98, %c0_99] : memref<2x16x128xf32, #tpu.memory_space<vmem>>, vector<1x1x32xf32>
    %206 = vector.shape_cast %205 : vector<1x1x32xf32> to vector<1x32xf32>
    %c1_100 = arith.constant 1 : index
    %c8_101 = arith.constant 8 : index
    %c0_102 = arith.constant 0 : index
    %207 = vector.load %arg8[%c1_100, %c8_101, %c0_102] : memref<2x16x128xf32, #tpu.memory_space<vmem>>, vector<1x1x32xf32>
    %208 = vector.shape_cast %207 : vector<1x1x32xf32> to vector<1x32xf32>
    %cst_103 = arith.constant dense<0.000000e+00> : vector<16xf32>
    %209 = vector.multi_reduction <add>, %204, %cst_103 [1] : vector<16x32xf32> to vector<16xf32>
    %210 = vector.shape_cast %209 : vector<16xf32> to vector<16x1xf32>
    %cst_104 = arith.constant 3.200000e+01 : f32
    %211 = vector.broadcast %cst_104 : f32 to vector<16x1xf32>
    %212 = arith.divf %210, %211 : vector<16x1xf32>
    %213 = vector.broadcast %212 : vector<16x1xf32> to vector<16x32xf32>
    %214 = arith.subf %204, %213 : vector<16x32xf32>
    %215 = arith.mulf %214, %214 : vector<16x32xf32>
    %cst_105 = arith.constant dense<0.000000e+00> : vector<16xf32>
    %216 = vector.multi_reduction <add>, %215, %cst_105 [1] : vector<16x32xf32> to vector<16xf32>
    %217 = vector.shape_cast %216 : vector<16xf32> to vector<16x1xf32>
    %cst_106 = arith.constant 3.200000e+01 : f32
    %218 = vector.broadcast %cst_106 : f32 to vector<16x1xf32>
    %219 = arith.divf %217, %218 : vector<16x1xf32>
    %cst_107 = arith.constant 9.99999974E-6 : f32
    %220 = vector.broadcast %cst_107 : f32 to vector<16x1xf32>
    %221 = arith.addf %219, %220 : vector<16x1xf32>
    %222 = math.rsqrt %221 : vector<16x1xf32>
    %223 = vector.broadcast %222 : vector<16x1xf32> to vector<16x32xf32>
    %224 = arith.mulf %214, %223 : vector<16x32xf32>
    %225 = vector.broadcast %206 : vector<1x32xf32> to vector<16x32xf32>
    %226 = arith.mulf %224, %225 : vector<16x32xf32>
    %227 = vector.broadcast %208 : vector<1x32xf32> to vector<16x32xf32>
    %228 = arith.addf %226, %227 : vector<16x32xf32>
    %229 = arith.truncf %228 : vector<16x32xf32> to vector<16x32xbf16>
    %c1_108 = arith.constant 1 : index
    %c0_109 = arith.constant 0 : index
    %c0_110 = arith.constant 0 : index
    %230 = vector.load %arg6[%c1_108, %c0_109, %c0_110] : memref<2x32x128xbf16, #tpu.memory_space<vmem>>, vector<1x32x128xbf16>
    %231 = vector.shape_cast %230 : vector<1x32x128xbf16> to vector<32x128xbf16>
    %cst_111 = arith.constant dense<0.000000e+00> : vector<16x128xf32>
    %232 = tpu.matmul %229, %231, %cst_111 {dimension_numbers = #tpu.dot_dimension_numbers<[1], [0], [0], [1], [0, 0, 1, 1], [], []>} : vector<16x32xbf16>, vector<32x128xbf16>, vector<16x128xf32> -> vector<16x128xf32>
    %c1_112 = arith.constant 1 : index
    %c3_113 = arith.constant 3 : index
    %c0_114 = arith.constant 0 : index
    %233 = vector.load %arg8[%c1_112, %c3_113, %c0_114] : memref<2x16x128xf32, #tpu.memory_space<vmem>>, vector<1x1x128xf32>
    %234 = vector.shape_cast %233 : vector<1x1x128xf32> to vector<1x128xf32>
    %235 = vector.broadcast %234 : vector<1x128xf32> to vector<16x128xf32>
    %236 = arith.addf %232, %235 : vector<16x128xf32>
    %cst_115 = arith.constant 0.000000e+00 : f32
    %237 = vector.broadcast %cst_115 : f32 to vector<16x128xf32>
    %238 = arith.maximumf %236, %237 : vector<16x128xf32>
    %239 = arith.truncf %238 : vector<16x128xf32> to vector<16x128xbf16>
    %c1_116 = arith.constant 1 : index
    %c0_117 = arith.constant 0 : index
    %c0_118 = arith.constant 0 : index
    %240 = vector.load %arg7[%c1_116, %c0_117, %c0_118] : memref<2x128x32xbf16, #tpu.memory_space<vmem>>, vector<1x128x32xbf16>
    %241 = vector.shape_cast %240 : vector<1x128x32xbf16> to vector<128x32xbf16>
    %cst_119 = arith.constant dense<0.000000e+00> : vector<16x32xf32>
    %242 = tpu.matmul %239, %241, %cst_119 {dimension_numbers = #tpu.dot_dimension_numbers<[1], [0], [0], [1], [0, 0, 1, 1], [], []>} : vector<16x128xbf16>, vector<128x32xbf16>, vector<16x32xf32> -> vector<16x32xf32>
    %c1_120 = arith.constant 1 : index
    %c4_121 = arith.constant 4 : index
    %c0_122 = arith.constant 0 : index
    %243 = vector.load %arg8[%c1_120, %c4_121, %c0_122] : memref<2x16x128xf32, #tpu.memory_space<vmem>>, vector<1x1x32xf32>
    %244 = vector.shape_cast %243 : vector<1x1x32xf32> to vector<1x32xf32>
    %245 = vector.broadcast %244 : vector<1x32xf32> to vector<16x32xf32>
    %246 = arith.addf %242, %245 : vector<16x32xf32>
    %247 = arith.addf %228, %246 : vector<16x32xf32>
    %c1_123 = arith.constant 1 : index
    %c9_124 = arith.constant 9 : index
    %c0_125 = arith.constant 0 : index
    %248 = vector.load %arg8[%c1_123, %c9_124, %c0_125] : memref<2x16x128xf32, #tpu.memory_space<vmem>>, vector<1x1x32xf32>
    %249 = vector.shape_cast %248 : vector<1x1x32xf32> to vector<1x32xf32>
    %c1_126 = arith.constant 1 : index
    %c10_127 = arith.constant 10 : index
    %c0_128 = arith.constant 0 : index
    %250 = vector.load %arg8[%c1_126, %c10_127, %c0_128] : memref<2x16x128xf32, #tpu.memory_space<vmem>>, vector<1x1x32xf32>
    %251 = vector.shape_cast %250 : vector<1x1x32xf32> to vector<1x32xf32>
    %cst_129 = arith.constant dense<0.000000e+00> : vector<16xf32>
    %252 = vector.multi_reduction <add>, %247, %cst_129 [1] : vector<16x32xf32> to vector<16xf32>
    %253 = vector.shape_cast %252 : vector<16xf32> to vector<16x1xf32>
    %cst_130 = arith.constant 3.200000e+01 : f32
    %254 = vector.broadcast %cst_130 : f32 to vector<16x1xf32>
    %255 = arith.divf %253, %254 : vector<16x1xf32>
    %256 = vector.broadcast %255 : vector<16x1xf32> to vector<16x32xf32>
    %257 = arith.subf %247, %256 : vector<16x32xf32>
    %258 = arith.mulf %257, %257 : vector<16x32xf32>
    %cst_131 = arith.constant dense<0.000000e+00> : vector<16xf32>
    %259 = vector.multi_reduction <add>, %258, %cst_131 [1] : vector<16x32xf32> to vector<16xf32>
    %260 = vector.shape_cast %259 : vector<16xf32> to vector<16x1xf32>
    %cst_132 = arith.constant 3.200000e+01 : f32
    %261 = vector.broadcast %cst_132 : f32 to vector<16x1xf32>
    %262 = arith.divf %260, %261 : vector<16x1xf32>
    %cst_133 = arith.constant 9.99999974E-6 : f32
    %263 = vector.broadcast %cst_133 : f32 to vector<16x1xf32>
    %264 = arith.addf %262, %263 : vector<16x1xf32>
    %265 = math.rsqrt %264 : vector<16x1xf32>
    %266 = vector.broadcast %265 : vector<16x1xf32> to vector<16x32xf32>
    %267 = arith.mulf %257, %266 : vector<16x32xf32>
    %268 = vector.broadcast %249 : vector<1x32xf32> to vector<16x32xf32>
    %269 = arith.mulf %267, %268 : vector<16x32xf32>
    %270 = vector.broadcast %251 : vector<1x32xf32> to vector<16x32xf32>
    %271 = arith.addf %269, %270 : vector<16x32xf32>
    %c0_134 = arith.constant 0 : index
    %c0_135 = arith.constant 0 : index
    %272 = vector.load %arg10[%c0_134, %c0_135] : memref<8x128xf32, #tpu.memory_space<vmem>>, vector<1x32xf32>
    %c1_136 = arith.constant 1 : index
    %c0_137 = arith.constant 0 : index
    %273 = vector.load %arg10[%c1_136, %c0_137] : memref<8x128xf32, #tpu.memory_space<vmem>>, vector<1x32xf32>
    %cst_138 = arith.constant dense<0.000000e+00> : vector<16xf32>
    %274 = vector.multi_reduction <add>, %271, %cst_138 [1] : vector<16x32xf32> to vector<16xf32>
    %275 = vector.shape_cast %274 : vector<16xf32> to vector<16x1xf32>
    %cst_139 = arith.constant 3.200000e+01 : f32
    %276 = vector.broadcast %cst_139 : f32 to vector<16x1xf32>
    %277 = arith.divf %275, %276 : vector<16x1xf32>
    %278 = vector.broadcast %277 : vector<16x1xf32> to vector<16x32xf32>
    %279 = arith.subf %271, %278 : vector<16x32xf32>
    %280 = arith.mulf %279, %279 : vector<16x32xf32>
    %cst_140 = arith.constant dense<0.000000e+00> : vector<16xf32>
    %281 = vector.multi_reduction <add>, %280, %cst_140 [1] : vector<16x32xf32> to vector<16xf32>
    %282 = vector.shape_cast %281 : vector<16xf32> to vector<16x1xf32>
    %cst_141 = arith.constant 3.200000e+01 : f32
    %283 = vector.broadcast %cst_141 : f32 to vector<16x1xf32>
    %284 = arith.divf %282, %283 : vector<16x1xf32>
    %cst_142 = arith.constant 9.99999974E-6 : f32
    %285 = vector.broadcast %cst_142 : f32 to vector<16x1xf32>
    %286 = arith.addf %284, %285 : vector<16x1xf32>
    %287 = math.rsqrt %286 : vector<16x1xf32>
    %288 = vector.broadcast %287 : vector<16x1xf32> to vector<16x32xf32>
    %289 = arith.mulf %279, %288 : vector<16x32xf32>
    %290 = vector.broadcast %272 : vector<1x32xf32> to vector<16x32xf32>
    %291 = arith.mulf %289, %290 : vector<16x32xf32>
    %292 = vector.broadcast %273 : vector<1x32xf32> to vector<16x32xf32>
    %293 = arith.addf %291, %292 : vector<16x32xf32>
    %294 = arith.truncf %293 : vector<16x32xf32> to vector<16x32xbf16>
    %c0_143 = arith.constant 0 : index
    %c0_144 = arith.constant 0 : index
    %295 = vector.load %arg9[%c0_143, %c0_144] : memref<32x128xbf16, #tpu.memory_space<vmem>>, vector<32x128xbf16>
    %cst_145 = arith.constant dense<0.000000e+00> : vector<16x128xf32>
    %296 = tpu.matmul %294, %295, %cst_145 {dimension_numbers = #tpu.dot_dimension_numbers<[1], [0], [0], [1], [0, 0, 1, 1], [], []>} : vector<16x32xbf16>, vector<32x128xbf16>, vector<16x128xf32> -> vector<16x128xf32>
    %c2_146 = arith.constant 2 : index
    %c0_147 = arith.constant 0 : index
    %297 = vector.load %arg10[%c2_146, %c0_147] : memref<8x128xf32, #tpu.memory_space<vmem>>, vector<1x128xf32>
    %298 = vector.broadcast %297 : vector<1x128xf32> to vector<16x128xf32>
    %299 = arith.addf %296, %298 : vector<16x128xf32>
    %c0_148 = arith.constant 0 : index
    %c0_149 = arith.constant 0 : index
    %300 = vector.load %arg11[%c0_148, %c0_149] : memref<16x128xf32, #tpu.memory_space<vmem>>, vector<16x128xf32>
    tpu.vector_store %arg11[%c0_148, %c0_149], %299 {strides = array<i32>} : memref<16x128xf32, #tpu.memory_space<vmem>>, vector<16x128xf32>,
    return
  }
}

</mosaic_0001>

<llo_original>
// kernel: forward.1
$region0: #{forward.1}
  #allocation0 [shape = 'u32[]', space=smem, size = 0x4, offset = 0x4, fixed_abs, tag = 'smem constant byte address 0x4 - core index']
  #allocation1 [shape = 'u32[144,128]{1,0:T(1,128)}', space=vmem, size = 0x12000, scoped, tag = 'internal scratch']
  %s0 = inlined_call_operand.vmem [shape: f32[16,32], index: 0, kind: input, shape index: {}]
  %s1 = inlined_call_operand.hbm [shape: f32[16,64], index: 1, kind: input, shape index: {}]
  %s2 = inlined_call_operand.hbm [shape: f32[64,32], index: 2, kind: input, shape index: {}]
  %s3 = inlined_call_operand.vmem [shape: f32[64,64], index: 3, kind: input, shape index: {}]
  %s4 = inlined_call_operand.hbm [shape: bf16[2,32,128], index: 4, kind: input, shape index: {}]
  %s5 = inlined_call_operand.hbm [shape: bf16[2,32,32], index: 5, kind: input, shape index: {}]
  %s6 = inlined_call_operand.hbm [shape: bf16[2,32,128], index: 6, kind: input, shape index: {}]
  %s7 = inlined_call_operand.vmem [shape: bf16[2,128,32], index: 7, kind: input, shape index: {}]
  %s8 = inlined_call_operand.hbm [shape: f32[2,16,128], index: 8, kind: input, shape index: {}]
  %s9 = inlined_call_operand.vmem [shape: bf16[32,128], index: 9, kind: input, shape index: {}]
  %s10 = inlined_call_operand.hbm [shape: f32[8,128], index: 10, kind: input, shape index: {}]
  %s11 = inlined_call_operand.vmem [shape: f32[16,128], index: 11, kind: output, shape index: {}]
  %s12 = sld [smem:[#allocation0]]
  $region82: #{forward.1} parent=0
    _
  %s14 = ssub.s32 1, %s12
  %s15 = scalar_select 0, %s14, %s12
  $region1: #{forward.1} parent=0
    #allocation2 [shape = 'u8[8192]{0}', space=vmem, size = 0x2000, scoped, tag = 'input window, operand 1, single buffered']
    #allocation3 [shape = 's32[1]{0}', space=sflag, size = 0x4, scoped, tag = 'scoped memory for forward.1']
    #allocation4 [shape = 'u8[32768]{0}', space=vmem, size = 0x8000, scoped, tag = 'input window, operand 2, single buffered']
    #allocation5 [shape = 's32[1]{0}', space=sflag, size = 0x4, scoped, tag = 'scoped memory for forward.1']
    #allocation6 [shape = 'u8[16384]{0}', space=vmem, size = 0x4000, scoped, tag = 'input window, operand 4, single buffered']
    #allocation7 [shape = 'u8[16384]{0}', space=vmem, size = 0x4000, scoped, tag = 'input window, operand 5, single buffered']
    #allocation8 [shape = 's32[1]{0}', space=sflag, size = 0x4, scoped, tag = 'scoped memory for forward.1']
    #allocation9 [shape = 'u8[16384]{0}', space=vmem, size = 0x4000, scoped, tag = 'input window, operand 6, single buffered']
    #allocation10 [shape = 'u8[16384]{0}', space=vmem, size = 0x4000, scoped, tag = 'input window, operand 8, single buffered']
    #allocation11 [shape = 's32[1]{0}', space=sflag, size = 0x4, scoped, tag = 'scoped memory for forward.1']
    #allocation12 [shape = 'u8[4096]{0}', space=vmem, size = 0x1000, scoped, tag = 'input window, operand 10, single buffered']
    %16 = vsyncpa [#allocation3], 0
    %17 = vsyncpa [#allocation5], 0
    %18 = vsyncpa [#allocation8], 0
    %19 = vsyncpa [#allocation11], 0
    // Predicated region
    $region2: #{forward.1} parent=1 // pred_check
      _
    $region3: #{forward.1} parent=1 // pred_check_branch
      %21 = sbr.rel (0) target = $region5
    $region4: #{forward.1} parent=1 // pred_region
      _
    $region5: #{forward.1} parent=1 // pred_fallthru
      _
    // Predicated region
    $region6: #{forward.1} parent=1 // pred_check
      _
    $region7: #{forward.1} parent=1 // pred_check_branch
      %23 = sbr.rel (0) target = $region9
    $region8: #{forward.1} parent=1 // pred_region
      %s25 = ssub.s32 256, 256
      %26 = vsyncadd [#allocation3], %s25
      %s27 = sshll.u32 [#allocation2], 4
      %s28 = int_to_ptr.vmem [resolvable:$true] %s27
      %33 = dma.hbm_to_vmem [thread:$0]  %s1, 256, %s28, [#allocation3], 128, 128, 8
    $region9: #{forward.1} parent=1 // pred_fallthru
      _
    // Predicated region
    $region10: #{forward.1} parent=1 // pred_check
      _
    $region11: #{forward.1} parent=1 // pred_check_branch
      %35 = sbr.rel (0) target = $region13
    $region12: #{forward.1} parent=1 // pred_region
      %s37 = ssub.s32 1024, 1024
      %38 = vsyncadd [#allocation5], %s37
      %s39 = sshll.u32 [#allocation4], 4
      %s40 = int_to_ptr.vmem [resolvable:$true] %s39
      %45 = dma.hbm_to_vmem [thread:$0]  %s2, 1024, %s40, [#allocation5], 128, 128, 8
    $region13: #{forward.1} parent=1 // pred_fallthru
      _
    // Predicated region
    $region14: #{forward.1} parent=1 // pred_check
      _
    $region15: #{forward.1} parent=1 // pred_check_branch
      %47 = sbr.rel (0) target = $region17
    $region16: #{forward.1} parent=1 // pred_region
      _
    $region17: #{forward.1} parent=1 // pred_fallthru
      _
    // Predicated region
    $region18: #{forward.1} parent=1 // pred_check
      _
    $region19: #{forward.1} parent=1 // pred_check_branch
      %49 = sbr.rel (0) target = $region21
    $region20: #{forward.1} parent=1 // pred_region
      %s51 = ssub.s32 512, 512
      %52 = vsyncadd [#allocation5], %s51
      %s53 = sshll.u32 [#allocation6], 4
      %s54 = int_to_ptr.vmem [resolvable:$true] %s53
      %59 = dma.hbm_to_vmem [thread:$0]  %s4, 512, %s54, [#allocation5], 64, 64, 4
    $region21: #{forward.1} parent=1 // pred_fallthru
      _
    // Predicated region
    $region22: #{forward.1} parent=1 // pred_check
      _
    $region23: #{forward.1} parent=1 // pred_check_branch
      %61 = sbr.rel (0) target = $region25
    $region24: #{forward.1} parent=1 // pred_region
      %s63 = ssub.s32 512, 512
      %64 = vsyncadd [#allocation8], %s63
      %s65 = sshll.u32 [#allocation7], 4
      %s66 = int_to_ptr.vmem [resolvable:$true] %s65
      %71 = dma.hbm_to_vmem [thread:$0]  %s5, 512, %s66, [#allocation8], 64, 64, 4
    $region25: #{forward.1} parent=1 // pred_fallthru
      _
    // Predicated region
    $region26: #{forward.1} parent=1 // pred_check
      _
    $region27: #{forward.1} parent=1 // pred_check_branch
      %73 = sbr.rel (0) target = $region29
    $region28: #{forward.1} parent=1 // pred_region
      %s75 = ssub.s32 512, 512
      %76 = vsyncadd [#allocation8], %s75
      %s77 = sshll.u32 [#allocation9], 4
      %s78 = int_to_ptr.vmem [resolvable:$true] %s77
      %83 = dma.hbm_to_vmem [thread:$0]  %s6, 512, %s78, [#allocation8], 64, 64, 4
    $region29: #{forward.1} parent=1 // pred_fallthru
      _
    // Predicated region
    $region30: #{forward.1} parent=1 // pred_check
      _
    $region31: #{forward.1} parent=1 // pred_check_branch
      %85 = sbr.rel (0) target = $region33
    $region32: #{forward.1} parent=1 // pred_region
      _
    $region33: #{forward.1} parent=1 // pred_fallthru
      _
    // Predicated region
    $region34: #{forward.1} parent=1 // pred_check
      _
    $region35: #{forward.1} parent=1 // pred_check_branch
      %87 = sbr.rel (0) target = $region37
    $region36: #{forward.1} parent=1 // pred_region
      %s89 = ssub.s32 512, 512
      %90 = vsyncadd [#allocation11], %s89
      %s91 = sshll.u32 [#allocation10], 4
      %s92 = int_to_ptr.vmem [resolvable:$true] %s91
      %97 = dma.hbm_to_vmem [thread:$0]  %s8, 512, %s92, [#allocation11], 128, 128, 8
    $region37: #{forward.1} parent=1 // pred_fallthru
      _
    // Predicated region
    $region38: #{forward.1} parent=1 // pred_check
      _
    $region39: #{forward.1} parent=1 // pred_check_branch
      %99 = sbr.rel (0) target = $region41
    $region40: #{forward.1} parent=1 // pred_region
      _
    $region41: #{forward.1} parent=1 // pred_fallthru
      _
    // Predicated region
    $region42: #{forward.1} parent=1 // pred_check
      _
    $region43: #{forward.1} parent=1 // pred_check_branch
      %101 = sbr.rel (0) target = $region45
    $region44: #{forward.1} parent=1 // pred_region
      %s103 = ssub.s32 128, 128
      %104 = vsyncadd [#allocation11], %s103
      %s106 = sshll.u32 [#allocation12], 4
      %s107 = int_to_ptr.vmem [resolvable:$true] %s106
      %109 = dma.hbm_to_vmem [thread:$0]  %s10, 128, %s107, [#allocation11]
    $region45: #{forward.1} parent=1 // pred_fallthru
      _
    // Predicated region
    $region46: #{forward.1} parent=1 // pred_check
      _
    $region47: #{forward.1} parent=1 // pred_check_branch
      %111 = sbr.rel (0) target = $region49
    $region48: #{forward.1} parent=1 // pred_region
      %112 = dma.done [#allocation3], 256
    $region49: #{forward.1} parent=1 // pred_fallthru
      _
    // Predicated region
    $region50: #{forward.1} parent=1 // pred_check
      _
    $region51: #{forward.1} parent=1 // pred_check_branch
      %114 = sbr.rel (0) target = $region53
    $region52: #{forward.1} parent=1 // pred_region
      %115 = dma.done [#allocation5], 1024
    $region53: #{forward.1} parent=1 // pred_fallthru
      _
    // Predicated region
    $region54: #{forward.1} parent=1 // pred_check
      _
    $region55: #{forward.1} parent=1 // pred_check_branch
      %117 = sbr.rel (0) target = $region57
    $region56: #{forward.1} parent=1 // pred_region
      %118 = dma.done [#allocation5], 512
    $region57: #{forward.1} parent=1 // pred_fallthru
      _
    // Predicated region
    $region58: #{forward.1} parent=1 // pred_check
      _
    $region59: #{forward.1} parent=1 // pred_check_branch
      %120 = sbr.rel (0) target = $region61
    $region60: #{forward.1} parent=1 // pred_region
      %121 = dma.done [#allocation8], 512
    $region61: #{forward.1} parent=1 // pred_fallthru
      _
    // Predicated region
    $region62: #{forward.1} parent=1 // pred_check
      _
    $region63: #{forward.1} parent=1 // pred_check_branch
      %123 = sbr.rel (0) target = $region65
    $region64: #{forward.1} parent=1 // pred_region
      %124 = dma.done [#allocation8], 512
    $region65: #{forward.1} parent=1 // pred_fallthru
      _
    // Predicated region
    $region66: #{forward.1} parent=1 // pred_check
      _
    $region67: #{forward.1} parent=1 // pred_check_branch
      %126 = sbr.rel (0) target = $region69
    $region68: #{forward.1} parent=1 // pred_region
      %127 = dma.done [#allocation11], 512
    $region69: #{forward.1} parent=1 // pred_fallthru
      _
    // Predicated region
    $region70: #{forward.1} parent=1 // pred_check
      _
    $region71: #{forward.1} parent=1 // pred_check_branch
      %129 = sbr.rel (0) target = $region73
    $region72: #{forward.1} parent=1 // pred_region
      %130 = dma.done [#allocation11], 128
    $region73: #{forward.1} parent=1 // pred_fallthru
      _
    %v132 = vld [vmem:[%s0] sm:$0xff]
    %v133 = vld [vmem:[%s0 + $0x8] sm:$0xff]
    %v134 = vld [vmem:[#allocation2] sm:$0xff]
    %v135 = vld [vmem:[#allocation2 + $0x8] sm:$0xff]
    %v136 = vld [vmem:[#allocation4] sm:$0xff]
    %v137 = vld [vmem:[#allocation4 + $0x8] sm:$0xff]
    %v138 = vld [vmem:[#allocation4 + $0x10] sm:$0xff]
    %v139 = vld [vmem:[#allocation4 + $0x18] sm:$0xff]
    %v140 = vld [vmem:[#allocation4 + $0x20] sm:$0xff]
    %v141 = vld [vmem:[#allocation4 + $0x28] sm:$0xff]
    %v142 = vld [vmem:[#allocation4 + $0x30] sm:$0xff]
    %v143 = vld [vmem:[#allocation4 + $0x38] sm:$0xff]
    %v144 = vld [vmem:[%s3] sm:$0xff]
    %v145 = vld [vmem:[%s3 + $0x8] sm:$0xff]
    %v146 = vld [vmem:[%s3 + $0x10] sm:$0xff]
    %v147 = vld [vmem:[%s3 + $0x18] sm:$0xff]
    %v148 = vld [vmem:[%s3 + $0x20] sm:$0xff]
    %v149 = vld [vmem:[%s3 + $0x28] sm:$0xff]
    %v150 = vld [vmem:[%s3 + $0x30] sm:$0xff]
    %v151 = vld [vmem:[%s3 + $0x38] sm:$0xff]
    %v152 = vpack.c.bf16 %v133, %v132
    %v153 = vld [vmem:[#allocation6] sm:$0xf]
    %v154 = vld [vmem:[#allocation6 + $0x4] sm:$0xf]
    %v155 = vld [vmem:[#allocation6 + $0x8] sm:$0xf]
    %v156 = vld [vmem:[#allocation6 + $0xc] sm:$0xf]
    %v157 = vld [vmem:[#allocation10] sm:$0x1]
    %v158 = vlaneseq
    %v159 = vshrl.u32 %v158, 7
    %v160 = vsub.s32 0, %v159
    %v161 = vrot.slane %v157, %v160
    %v166 = vunpack.c.l.b16 %v153
    %v167 = vunpack.c.l.b16 %v154
    %v168 = vunpack.c.l.b16 %v155
    %v169 = vunpack.c.l.b16 %v156
    %v170 = vpack.c.b16 %v167, %v166
    %v171 = vpack.c.b16 %v169, %v168
    %vm174 = vcmask 261120
    %v176 = vsel %vm174, %v152, 0
    %178 = vmatprep.subr.bf16.mxu0 0
    %179 = vmatpush1.bf16.msra.mxu0 %v170
    %180 = vmatprep.subr.bf16.mxu0 0
    %181 = vmatpush1.bf16.msra.mxu0 %v171
    %182 = vmatprep.subr.bf16.mxu0 0
    %183 = vmatpush1.bf16.msra.mxu0 0
    %184 = vmatprep.subr.bf16.mxu0 0
    %185 = vmatpush1.bf16.msra.mxu0 0
    %186 = vmatprep.subr.bf16.mxu0 0
    %187 = vmatpush1.bf16.msra.mxu0 0
    %188 = vmatprep.subr.bf16.mxu0 0
    %189 = vmatpush1.bf16.msra.mxu0 0
    %190 = vmatprep.subr.bf16.mxu0 0
    %191 = vmatpush1.bf16.msra.mxu0 0
    %192 = vmatprep.subr.bf16.mxu0 0
    %193 = vmatpush1.bf16.msra.mxu0 0
    %194 = vmatprep.subr.bf16.mxu0 0
    %195 = vmatpush1.bf16.msra.mxu0 0
    %196 = vmatprep.subr.bf16.mxu0 0
    %197 = vmatpush1.bf16.msra.mxu0 0
    %198 = vmatprep.subr.bf16.mxu0 0
    %199 = vmatpush1.bf16.msra.mxu0 0
    %200 = vmatprep.subr.bf16.mxu0 0
    %201 = vmatpush1.bf16.msra.mxu0 0
    %202 = vmatprep.subr.bf16.mxu0 0
    %203 = vmatpush1.bf16.msra.mxu0 0
    %204 = vmatprep.subr.bf16.mxu0 0
    %205 = vmatpush1.bf16.msra.mxu0 0
    %206 = vmatprep.subr.bf16.mxu0 0
    %207 = vmatpush1.bf16.msra.mxu0 0
    %208 = vmatprep.subr.bf16.mxu0 0
    %209 = vmatpush1.bf16.msra.mxu0 0
    %210 = vmatprep.mubr.bf16.mxu0 0
    %211 = vmatmul.mubr.bf16.gmra.mrb[0].mxu0 %v176
    %v212 = vpop.f32.mrb[0].mxu0
    %v213 = vadd.f32 %v161, %v212
    %v214 = vpop.f32.mrb[0].mxu0
    %v215 = vpop.f32.mrb[0].mxu0
    %v216 = vadd.f32 %v161, %v215
    %v217 = vpop.f32.mrb[0].mxu0
    %218 = vdwg.mxu0
    %227 = vrot.lane.b32.xlu0 %v136, 32
    %v228 = vpop.permute.xlu0 %227
    %229 = vrot.lane.b32.xlu0 %v137, 32
    %v230 = vpop.permute.xlu0 %229
    %231 = vrot.lane.b32.xlu0 %v138, 32
    %v232 = vpop.permute.xlu0 %231
    %233 = vrot.lane.b32.xlu0 %v139, 32
    %v234 = vpop.permute.xlu0 %233
    %235 = vrot.lane.b32.xlu0 %v140, 32
    %v236 = vpop.permute.xlu0 %235
    %237 = vrot.lane.b32.xlu0 %v141, 32
    %v238 = vpop.permute.xlu0 %237
    %239 = vrot.lane.b32.xlu0 %v142, 32
    %v240 = vpop.permute.xlu0 %239
    %241 = vrot.lane.b32.xlu0 %v143, 32
    %v242 = vpop.permute.xlu0 %241
    %v251 = vmul.f32 %v213, %v228
    %v252 = vmul.f32 %v216, %v230
    %v253 = vmul.f32 %v213, %v232
    %v254 = vmul.f32 %v216, %v234
    %v255 = vmul.f32 %v213, %v236
    %v256 = vmul.f32 %v216, %v238
    %v257 = vmul.f32 %v213, %v240
    %v258 = vmul.f32 %v216, %v242
    %259 = vrot.lane.b32.xlu0 %v136, 64
    %v260 = vpop.permute.xlu0 %259
    %261 = vrot.lane.b32.xlu0 %v137, 64
    %v262 = vpop.permute.xlu0 %261
    %263 = vrot.lane.b32.xlu0 %v138, 64
    %v264 = vpop.permute.xlu0 %263
    %265 = vrot.lane.b32.xlu0 %v139, 64
    %v266 = vpop.permute.xlu0 %265
    %267 = vrot.lane.b32.xlu0 %v140, 64
    %v268 = vpop.permute.xlu0 %267
    %269 = vrot.lane.b32.xlu0 %v141, 64
    %v270 = vpop.permute.xlu0 %269
    %271 = vrot.lane.b32.xlu0 %v142, 64
    %v272 = vpop.permute.xlu0 %271
    %273 = vrot.lane.b32.xlu0 %v143, 64
    %v274 = vpop.permute.xlu0 %273
    %v283 = vmul.f32 %v213, %v260
    %v284 = vmul.f32 %v216, %v262
    %v285 = vmul.f32 %v213, %v264
    %v286 = vmul.f32 %v216, %v266
    %v287 = vmul.f32 %v213, %v268
    %v288 = vmul.f32 %v216, %v270
    %v289 = vmul.f32 %v213, %v272
    %v290 = vmul.f32 %v216, %v274
    %v291 = vpack.c.bf16 %v216, %v213
    %v292 = vpack.c.bf16 %v252, %v251
    %v293 = vpack.c.bf16 %v254, %v253
    %v294 = vpack.c.bf16 %v256, %v255
    %v295 = vpack.c.bf16 %v258, %v257
    %300 = vrot.lane.b32.xlu0 %v292, 96
    %v301 = vpop.permute.xlu0 %300
    %302 = vrot.lane.b32.xlu0 %v293, 96
    %v303 = vpop.permute.xlu0 %302
    %304 = vrot.lane.b32.xlu0 %v294, 96
    %v305 = vpop.permute.xlu0 %304
    %306 = vrot.lane.b32.xlu0 %v295, 96
    %v307 = vpop.permute.xlu0 %306
    %v309 = vsel %vm174, %v291, 0
    %v312 = vsel %vm174, %v301, 0
    %v315 = vsel %vm174, %v303, 0
    %v318 = vsel %vm174, %v305, 0
    %v321 = vsel %vm174, %v307, 0
    %323 = vmatprep.subr.bf16.mxu0 0
    %324 = vmatpush1.bf16.xpose.msra.mxu0 %v312
    %325 = vmatprep.subr.bf16.mxu0 0
    %326 = vmatpush1.bf16.xpose.msra.mxu0 %v315
    %327 = vmatprep.subr.bf16.mxu0 0
    %328 = vmatpush1.bf16.xpose.msra.mxu0 %v318
    %329 = vmatprep.subr.bf16.mxu0 0
    %330 = vmatpush1.bf16.xpose.msra.mxu0 %v321
    %331 = vmatprep.subr.bf16.mxu0 0
    %332 = vmatpush1.bf16.xpose.msra.mxu0 0
    %333 = vmatprep.subr.bf16.mxu0 0
    %334 = vmatpush1.bf16.xpose.msra.mxu0 0
    %335 = vmatprep.subr.bf16.mxu0 0
    %336 = vmatpush1.bf16.xpose.msra.mxu0 0
    %337 = vmatprep.subr.bf16.mxu0 0
    %338 = vmatpush1.bf16.xpose.msra.mxu0 0
    %339 = vmatprep.subr.bf16.mxu0 0
    %340 = vmatpush1.bf16.xpose.msra.mxu0 0
    %341 = vmatprep.subr.bf16.mxu0 0
    %342 = vmatpush1.bf16.xpose.msra.mxu0 0
    %343 = vmatprep.subr.bf16.mxu0 0
    %344 = vmatpush1.bf16.xpose.msra.mxu0 0
    %345 = vmatprep.subr.bf16.mxu0 0
    %346 = vmatpush1.bf16.xpose.msra.mxu0 0
    %347 = vmatprep.subr.bf16.mxu0 0
    %348 = vmatpush1.bf16.xpose.msra.mxu0 0
    %349 = vmatprep.subr.bf16.mxu0 0
    %350 = vmatpush1.bf16.xpose.msra.mxu0 0
    %351 = vmatprep.subr.bf16.mxu0 0
    %352 = vmatpush1.bf16.xpose.msra.mxu0 0
    %353 = vmatprep.subr.bf16.mxu0 0
    %354 = vmatpush1.bf16.xpose.msra.mxu0 0
    %355 = vmatprep.mubr.bf16.mxu0 0
    %356 = vmatmul.mubr.bf16.gmra.mrb[0].mxu0 %v309
    %v357 = vpop.f32.mrb[0].mxu0
    %v358 = vadd.f32 %v134, %v357
    %v359 = vpop.f32.mrb[0].mxu0
    %v360 = vpop.f32.mrb[0].mxu0
    %v361 = vadd.f32 %v135, %v360
    %v362 = vpop.f32.mrb[0].mxu0
    %363 = vdwg.mxu0
    %vm364 = vcmask 523264
    %v365 = vsel %vm364, %v358, -inf
    %366 = vmax.xlane.f32.xlu0 %v365
    %v367 = vpop.xlane.xlu0 %366
    %v368 = vsel %vm364, %v361, -inf
    %369 = vmax.xlane.f32.xlu0 %v368
    %v370 = vpop.xlane.xlu0 %369
    %v371 = vsub.f32 %v358, %v367
    %v372 = vsub.f32 %v361, %v370
    %v373 = vmul.f32 %v371, 1.442695
    %v374 = vpow.pop %v373
    %v375 = vmul.f32 %v372, 1.442695
    %v376 = vpow.pop %v375
    %v378 = vsel %vm364, %v374, 0
    %v381 = vsel %vm364, %v376, 0
    %383 = vmatprep.subr.mxu0 0.0
    %384 = vmatpush1.msra.mxu0 %v144
    %385 = vmatprep.subr.mxu0 0.0
    %386 = vmatpush1.msra.mxu0 %v145
    %387 = vmatprep.subr.mxu0 0.0
    %388 = vmatpush1.msra.mxu0 %v146
    %389 = vmatprep.subr.mxu0 0.0
    %390 = vmatpush1.msra.mxu0 %v147
    %391 = vmatprep.subr.mxu0 0.0
    %392 = vmatpush1.msra.mxu0 %v148
    %393 = vmatprep.subr.mxu0 0.0
    %394 = vmatpush1.msra.mxu0 %v149
    %395 = vmatprep.subr.mxu0 0.0
    %396 = vmatpush1.msra.mxu0 %v150
    %397 = vmatprep.subr.mxu0 0.0
    %398 = vmatpush1.msra.mxu0 %v151
    %399 = vmatprep.subr.mxu0 0.0
    %400 = vmatpush1.msra.mxu0 0.0
    %401 = vmatprep.subr.mxu0 0.0
    %402 = vmatpush1.msra.mxu0 0.0
    %403 = vmatprep.subr.mxu0 0.0
    %404 = vmatpush1.msra.mxu0 0.0
    %405 = vmatprep.subr.mxu0 0.0
    %406 = vmatpush1.msra.mxu0 0.0
    %407 = vmatprep.subr.mxu0 0.0
    %408 = vmatpush1.msra.mxu0 0.0
    %409 = vmatprep.subr.mxu0 0.0
    %410 = vmatpush1.msra.mxu0 0.0
    %411 = vmatprep.subr.mxu0 0.0
    %412 = vmatpush1.msra.mxu0 0.0
    %413 = vmatprep.subr.mxu0 0.0
    %414 = vmatpush1.msra.mxu0 0.0
    %415 = vmatprep.subr.mxu0 0.0
    %416 = vmatpush1.msra.mxu0 0.0
    %417 = vmatprep.subr.mxu0 0.0
    %418 = vmatpush1.msra.mxu0 0.0
    %419 = vmatprep.subr.mxu0 0.0
    %420 = vmatpush1.msra.mxu0 0.0
    %421 = vmatprep.subr.mxu0 0.0
    %422 = vmatpush1.msra.mxu0 0.0
    %423 = vmatprep.subr.mxu0 0.0
    %424 = vmatpush1.msra.mxu0 0.0
    %425 = vmatprep.subr.mxu0 0.0
    %426 = vmatpush1.msra.mxu0 0.0
    %427 = vmatprep.subr.mxu0 0.0
    %428 = vmatpush1.msra.mxu0 0.0
    %429 = vmatprep.subr.mxu0 0.0
    %430 = vmatpush1.msra.mxu0 0.0
    %431 = vmatprep.subr.mxu0 0.0
    %432 = vmatpush1.msra.mxu0 0.0
    %433 = vmatprep.subr.mxu0 0.0
    %434 = vmatpush1.msra.mxu0 0.0
    %435 = vmatprep.subr.mxu0 0.0
    %436 = vmatpush1.msra.mxu0 0.0
    %437 = vmatprep.subr.mxu0 0.0
    %438 = vmatpush1.msra.mxu0 0.0
    %439 = vmatprep.subr.mxu0 0.0
    %440 = vmatpush1.msra.mxu0 0.0
    %441 = vmatprep.subr.mxu0 0.0
    %442 = vmatpush1.msra.mxu0 0.0
    %443 = vmatprep.subr.mxu0 0.0
    %444 = vmatpush1.msra.mxu0 0.0
    %445 = vmatprep.subr.mxu0 0.0
    %446 = vmatpush1.msra.mxu0 0.0
    %447 = vmatprep.mubr.f32.mxu0 0.0
    %448 = vmatmul.mubr.f32.gmra.mrb[0].mxu0 %v378
    %v449 = vpop.f32.mrb[0].mxu0
    %v450 = vadd.f32 0.0, %v449
    %v451 = vpop.f32.mrb[0].mxu0
    %452 = vmatprep.mubr.f32.mxu0 0.0
    %453 = vmatmul.mubr.f32.gmra.mrb[0].mxu0 %v381
    %v454 = vpop.f32.mrb[0].mxu0
    %v455 = vadd.f32 0.0, %v454
    %v456 = vpop.f32.mrb[0].mxu0
    %457 = vdwg.mxu0
    %v458 = vrcp.pop %v450
    %v459 = vrcp.pop %v455
    %v460 = vmul.f32 %v374, %v458
    %v461 = vmul.f32 %v376, %v459
    %v462 = vpack.c.bf16 %v461, %v460
    %v463 = vpack.c.bf16 %v284, %v283
    %v464 = vpack.c.bf16 %v286, %v285
    %v465 = vpack.c.bf16 %v288, %v287
    %v466 = vpack.c.bf16 %v290, %v289
    %471 = vrot.lane.b32.xlu0 %v463, 64
    %v472 = vpop.permute.xlu0 %471
    %473 = vrot.lane.b32.xlu0 %v464, 64
    %v474 = vpop.permute.xlu0 %473
    %475 = vrot.lane.b32.xlu0 %v465, 64
    %v476 = vpop.permute.xlu0 %475
    %477 = vrot.lane.b32.xlu0 %v466, 64
    %v478 = vpop.permute.xlu0 %477
    %v484 = vsel %vm364, %v462, 0
    %486 = vmatprep.subr.bf16.mxu0 0
    %487 = vmatpush1.bf16.msra.mxu0 %v472
    %488 = vmatprep.subr.bf16.mxu0 0
    %489 = vmatpush1.bf16.msra.mxu0 %v474
    %490 = vmatprep.subr.bf16.mxu0 0
    %491 = vmatpush1.bf16.msra.mxu0 %v476
    %492 = vmatprep.subr.bf16.mxu0 0
    %493 = vmatpush1.bf16.msra.mxu0 %v478
    %494 = vmatprep.subr.bf16.mxu0 0
    %495 = vmatpush1.bf16.msra.mxu0 0
    %496 = vmatprep.subr.bf16.mxu0 0
    %497 = vmatpush1.bf16.msra.mxu0 0
    %498 = vmatprep.subr.bf16.mxu0 0
    %499 = vmatpush1.bf16.msra.mxu0 0
    %500 = vmatprep.subr.bf16.mxu0 0
    %501 = vmatpush1.bf16.msra.mxu0 0
    %502 = vmatprep.subr.bf16.mxu0 0
    %503 = vmatpush1.bf16.msra.mxu0 0
    %504 = vmatprep.subr.bf16.mxu0 0
    %505 = vmatpush1.bf16.msra.mxu0 0
    %506 = vmatprep.subr.bf16.mxu0 0
    %507 = vmatpush1.bf16.msra.mxu0 0
    %508 = vmatprep.subr.bf16.mxu0 0
    %509 = vmatpush1.bf16.msra.mxu0 0
    %510 = vmatprep.subr.bf16.mxu0 0
    %511 = vmatpush1.bf16.msra.mxu0 0
    %512 = vmatprep.subr.bf16.mxu0 0
    %513 = vmatpush1.bf16.msra.mxu0 0
    %514 = vmatprep.subr.bf16.mxu0 0
    %515 = vmatpush1.bf16.msra.mxu0 0
    %516 = vmatprep.subr.bf16.mxu0 0
    %517 = vmatpush1.bf16.msra.mxu0 0
    %518 = vmatprep.mubr.bf16.mxu0 0
    %519 = vmatmul.mubr.bf16.gmra.mrb[0].mxu0 %v484
    %v520 = vpop.f32.mrb[0].mxu0
    %v521 = vadd.f32 0.0, %v520
    %v522 = vpop.f32.mrb[0].mxu0
    %v523 = vpop.f32.mrb[0].mxu0
    %v524 = vadd.f32 0.0, %v523
    %v525 = vpop.f32.mrb[0].mxu0
    %526 = vdwg.mxu0
    %v527 = vpack.c.bf16 %v524, %v521
    %v528 = vld [vmem:[#allocation7] sm:$0xf]
    %v529 = vld [vmem:[#allocation7 + $0x4] sm:$0xf]
    %v530 = vld [vmem:[#allocation7 + $0x8] sm:$0xf]
    %v531 = vld [vmem:[#allocation7 + $0xc] sm:$0xf]
    %v532 = vld [vmem:[#allocation10 + $0x1] sm:$0x1]
    %v533 = vlaneseq
    %v534 = vshrl.u32 %v533, 7
    %v535 = vsub.s32 0, %v534
    %v536 = vrot.slane %v532, %v535
    %v541 = vunpack.c.l.b16 %v528
    %v542 = vunpack.c.l.b16 %v529
    %v543 = vunpack.c.l.b16 %v530
    %v544 = vunpack.c.l.b16 %v531
    %v545 = vpack.c.b16 %v542, %v541
    %v546 = vpack.c.b16 %v544, %v543
    %v550 = vsel %vm174, %v527, 0
    %552 = vmatprep.subr.bf16.mxu0 0
    %553 = vmatpush1.bf16.msra.mxu0 %v545
    %554 = vmatprep.subr.bf16.mxu0 0
    %555 = vmatpush1.bf16.msra.mxu0 %v546
    %556 = vmatprep.subr.bf16.mxu0 0
    %557 = vmatpush1.bf16.msra.mxu0 0
    %558 = vmatprep.subr.bf16.mxu0 0
    %559 = vmatpush1.bf16.msra.mxu0 0
    %560 = vmatprep.subr.bf16.mxu0 0
    %561 = vmatpush1.bf16.msra.mxu0 0
    %562 = vmatprep.subr.bf16.mxu0 0
    %563 = vmatpush1.bf16.msra.mxu0 0
    %564 = vmatprep.subr.bf16.mxu0 0
    %565 = vmatpush1.bf16.msra.mxu0 0
    %566 = vmatprep.subr.bf16.mxu0 0
    %567 = vmatpush1.bf16.msra.mxu0 0
    %568 = vmatprep.subr.bf16.mxu0 0
    %569 = vmatpush1.bf16.msra.mxu0 0
    %570 = vmatprep.subr.bf16.mxu0 0
    %571 = vmatpush1.bf16.msra.mxu0 0
    %572 = vmatprep.subr.bf16.mxu0 0
    %573 = vmatpush1.bf16.msra.mxu0 0
    %574 = vmatprep.subr.bf16.mxu0 0
    %575 = vmatpush1.bf16.msra.mxu0 0
    %576 = vmatprep.subr.bf16.mxu0 0
    %577 = vmatpush1.bf16.msra.mxu0 0
    %578 = vmatprep.subr.bf16.mxu0 0
    %579 = vmatpush1.bf16.msra.mxu0 0
    %580 = vmatprep.subr.bf16.mxu0 0
    %581 = vmatpush1.bf16.msra.mxu0 0
    %582 = vmatprep.subr.bf16.mxu0 0
    %583 = vmatpush1.bf16.msra.mxu0 0
    %584 = vmatprep.mubr.bf16.mxu0 0
    %585 = vmatmul.mubr.bf16.gmra.mrb[0].mxu0 %v550
    %v586 = vpop.f32.mrb[0].mxu0
    %v587 = vadd.f32 %v536, %v586
    %v588 = vpop.f32.mrb[0].mxu0
    %v589 = vpop.f32.mrb[0].mxu0
    %v590 = vadd.f32 %v536, %v589
    %v591 = vpop.f32.mrb[0].mxu0
    %592 = vdwg.mxu0
    %v593 = vadd.f32 %v132, %v587
    %v594 = vadd.f32 %v133, %v590
    %v595 = vld [vmem:[#allocation10 + $0x5] sm:$0x1]
    %v596 = vld [vmem:[#allocation10 + $0x6] sm:$0x1]
    %v597 = vsel %vm174, %v593, 0.0
    %598 = vadd.xlane.f32.xlu0 %v597
    %v599 = vpop.xlane.xlu0 %598
    %v600 = vsel %vm174, %v594, 0.0
    %601 = vadd.xlane.f32.xlu0 %v600
    %v602 = vpop.xlane.xlu0 %601
    %v603 = vrcp.pop 32.0
    %v604 = vmul.f32 %v599, %v603
    %v605 = vmul.f32 %v602, %v603
    %v606 = vsub.f32 %v593, %v604
    %v607 = vsub.f32 %v594, %v605
    %v608 = vmul.f32 %v606, %v606
    %v609 = vmul.f32 %v607, %v607
    %v610 = vsel %vm174, %v608, 0.0
    %611 = vadd.xlane.f32.xlu0 %v610
    %v612 = vpop.xlane.xlu0 %611
    %v613 = vsel %vm174, %v609, 0.0
    %614 = vadd.xlane.f32.xlu0 %v613
    %v615 = vpop.xlane.xlu0 %614
    %v616 = vmul.f32 %v612, %v603
    %v617 = vmul.f32 %v615, %v603
    %v618 = vadd.f32 %v616, 1e-05
    %v619 = vadd.f32 %v617, 1e-05
    %v620 = vrsqrt.pop %v618
    %v621 = vrsqrt.pop %v619
    %v622 = vmul.f32 %v606, %v620
    %v623 = vmul.f32 %v607, %v621
    %v624 = vlaneseq
    %v625 = vshrl.u32 %v624, 7
    %v626 = vsub.s32 0, %v625
    %v627 = vrot.slane %v595, %v626
    %v628 = vmul.f32 %v622, %v627
    %v629 = vmul.f32 %v623, %v627
    %v630 = vlaneseq
    %v631 = vshrl.u32 %v630, 7
    %v632 = vsub.s32 0, %v631
    %v633 = vrot.slane %v596, %v632
    %v634 = vadd.f32 %v628, %v633
    %v635 = vadd.f32 %v629, %v633
    %v636 = vld [vmem:[#allocation10 + $0x2] sm:$0x1]
    %v637 = vlaneseq
    %v638 = vshrl.u32 %v637, 7
    %v639 = vsub.s32 0, %v638
    %v640 = vrot.slane %v636, %v639
    %v641 = vadd.f32 %v634, %v640
    %v642 = vadd.f32 %v635, %v640
    %v643 = vld [vmem:[#allocation10 + $0x7] sm:$0x1]
    %v644 = vld [vmem:[#allocation10 + $0x8] sm:$0x1]
    %v645 = vsel %vm174, %v641, 0.0
    %646 = vadd.xlane.f32.xlu0 %v645
    %v647 = vpop.xlane.xlu0 %646
    %v648 = vsel %vm174, %v642, 0.0
    %649 = vadd.xlane.f32.xlu0 %v648
    %v650 = vpop.xlane.xlu0 %649
    %v651 = vmul.f32 %v647, %v603
    %v652 = vmul.f32 %v650, %v603
    %v653 = vsub.f32 %v641, %v651
    %v654 = vsub.f32 %v642, %v652
    %v655 = vmul.f32 %v653, %v653
    %v656 = vmul.f32 %v654, %v654
    %v657 = vsel %vm174, %v655, 0.0
    %658 = vadd.xlane.f32.xlu0 %v657
    %v659 = vpop.xlane.xlu0 %658
    %v660 = vsel %vm174, %v656, 0.0
    %661 = vadd.xlane.f32.xlu0 %v660
    %v662 = vpop.xlane.xlu0 %661
    %v663 = vmul.f32 %v659, %v603
    %v664 = vmul.f32 %v662, %v603
    %v665 = vadd.f32 %v663, 1e-05
    %v666 = vadd.f32 %v664, 1e-05
    %v667 = vrsqrt.pop %v665
    %v668 = vrsqrt.pop %v666
    %v669 = vmul.f32 %v653, %v667
    %v670 = vmul.f32 %v654, %v668
    %v671 = vlaneseq
    %v672 = vshrl.u32 %v671, 7
    %v673 = vsub.s32 0, %v672
    %v674 = vrot.slane %v643, %v673
    %v675 = vmul.f32 %v669, %v674
    %v676 = vmul.f32 %v670, %v674
    %v677 = vlaneseq
    %v678 = vshrl.u32 %v677, 7
    %v679 = vsub.s32 0, %v678
    %v680 = vrot.slane %v644, %v679
    %v681 = vadd.f32 %v675, %v680
    %v682 = vadd.f32 %v676, %v680
    %v683 = vpack.c.bf16 %v682, %v681
    %v684 = vld [vmem:[#allocation9] sm:$0xf]
    %v685 = vld [vmem:[#allocation9 + $0x4] sm:$0xf]
    %v686 = vld [vmem:[#allocation9 + $0x8] sm:$0xf]
    %v687 = vld [vmem:[#allocation9 + $0xc] sm:$0xf]
    %v688 = vld [vmem:[#allocation10 + $0x3] sm:$0x1]
    %v689 = vlaneseq
    %v690 = vshrl.u32 %v689, 7
    %v691 = vsub.s32 0, %v690
    %v692 = vrot.slane %v688, %v691
    %v697 = vunpack.c.l.b16 %v684
    %v698 = vunpack.c.l.b16 %v685
    %v699 = vunpack.c.l.b16 %v686
    %v700 = vunpack.c.l.b16 %v687
    %v701 = vpack.c.b16 %v698, %v697
    %v702 = vpack.c.b16 %v700, %v699
    %v706 = vsel %vm174, %v683, 0
    %708 = vmatprep.subr.bf16.mxu0 0
    %709 = vmatpush1.bf16.msra.mxu0 %v701
    %710 = vmatprep.subr.bf16.mxu0 0
    %711 = vmatpush1.bf16.msra.mxu0 %v702
    %712 = vmatprep.subr.bf16.mxu0 0
    %713 = vmatpush1.bf16.msra.mxu0 0
    %714 = vmatprep.subr.bf16.mxu0 0
    %715 = vmatpush1.bf16.msra.mxu0 0
    %716 = vmatprep.subr.bf16.mxu0 0
    %717 = vmatpush1.bf16.msra.mxu0 0
    %718 = vmatprep.subr.bf16.mxu0 0
    %719 = vmatpush1.bf16.msra.mxu0 0
    %720 = vmatprep.subr.bf16.mxu0 0
    %721 = vmatpush1.bf16.msra.mxu0 0
    %722 = vmatprep.subr.bf16.mxu0 0
    %723 = vmatpush1.bf16.msra.mxu0 0
    %724 = vmatprep.subr.bf16.mxu0 0
    %725 = vmatpush1.bf16.msra.mxu0 0
    %726 = vmatprep.subr.bf16.mxu0 0
    %727 = vmatpush1.bf16.msra.mxu0 0
    %728 = vmatprep.subr.bf16.mxu0 0
    %729 = vmatpush1.bf16.msra.mxu0 0
    %730 = vmatprep.subr.bf16.mxu0 0
    %731 = vmatpush1.bf16.msra.mxu0 0
    %732 = vmatprep.subr.bf16.mxu0 0
    %733 = vmatpush1.bf16.msra.mxu0 0
    %734 = vmatprep.subr.bf16.mxu0 0
    %735 = vmatpush1.bf16.msra.mxu0 0
    %736 = vmatprep.subr.bf16.mxu0 0
    %737 = vmatpush1.bf16.msra.mxu0 0
    %738 = vmatprep.subr.bf16.mxu0 0
    %739 = vmatpush1.bf16.msra.mxu0 0
    %740 = vmatprep.mubr.bf16.mxu0 0
    %741 = vmatmul.mubr.bf16.gmra.mrb[0].mxu0 %v706
    %v742 = vpop.f32.mrb[0].mxu0
    %v743 = vadd.f32 %v692, %v742
    %v744 = vpop.f32.mrb[0].mxu0
    %v745 = vpop.f32.mrb[0].mxu0
    %v746 = vadd.f32 %v692, %v745
    %v747 = vpop.f32.mrb[0].mxu0
    %748 = vdwg.mxu0
    %v749 = vmax.f32 %v743, 0.0
    %v750 = vmax.f32 %v746, 0.0
    %v751 = vpack.c.bf16 %v750, %v749
    %v752 = vld [vmem:[%s7] sm:$0xf]
    %v753 = vld [vmem:[%s7 + $0x4] sm:$0xf]
    %v754 = vld [vmem:[%s7 + $0x8] sm:$0xf]
    %v755 = vld [vmem:[%s7 + $0xc] sm:$0xf]
    %v756 = vld [vmem:[%s7 + $0x10] sm:$0xf]
    %v757 = vld [vmem:[%s7 + $0x14] sm:$0xf]
    %v758 = vld [vmem:[%s7 + $0x18] sm:$0xf]
    %v759 = vld [vmem:[%s7 + $0x1c] sm:$0xf]
    %v760 = vld [vmem:[%s7 + $0x20] sm:$0xf]
    %v761 = vld [vmem:[%s7 + $0x24] sm:$0xf]
    %v762 = vld [vmem:[%s7 + $0x28] sm:$0xf]
    %v763 = vld [vmem:[%s7 + $0x2c] sm:$0xf]
    %v764 = vld [vmem:[%s7 + $0x30] sm:$0xf]
    %v765 = vld [vmem:[%s7 + $0x34] sm:$0xf]
    %v766 = vld [vmem:[%s7 + $0x38] sm:$0xf]
    %v767 = vld [vmem:[%s7 + $0x3c] sm:$0xf]
    %v768 = vld [vmem:[#allocation10 + $0x4] sm:$0x1]
    %v769 = vlaneseq
    %v770 = vshrl.u32 %v769, 7
    %v771 = vsub.s32 0, %v770
    %v772 = vrot.slane %v768, %v771
    %v789 = vunpack.c.l.b16 %v752
    %v790 = vunpack.c.l.b16 %v753
    %v791 = vunpack.c.l.b16 %v754
    %v792 = vunpack.c.l.b16 %v755
    %v793 = vunpack.c.l.b16 %v756
    %v794 = vunpack.c.l.b16 %v757
    %v795 = vunpack.c.l.b16 %v758
    %v796 = vunpack.c.l.b16 %v759
    %v797 = vunpack.c.l.b16 %v760
    %v798 = vunpack.c.l.b16 %v761
    %v799 = vunpack.c.l.b16 %v762
    %v800 = vunpack.c.l.b16 %v763
    %v801 = vunpack.c.l.b16 %v764
    %v802 = vunpack.c.l.b16 %v765
    %v803 = vunpack.c.l.b16 %v766
    %v804 = vunpack.c.l.b16 %v767
    %v805 = vpack.c.b16 %v790, %v789
    %v806 = vpack.c.b16 %v792, %v791
    %v807 = vpack.c.b16 %v794, %v793
    %v808 = vpack.c.b16 %v796, %v795
    %v809 = vpack.c.b16 %v798, %v797
    %v810 = vpack.c.b16 %v800, %v799
    %v811 = vpack.c.b16 %v802, %v801
    %v812 = vpack.c.b16 %v804, %v803
    %821 = vmatprep.subr.bf16.mxu0 0
    %822 = vmatpush1.bf16.msra.mxu0 %v805
    %823 = vmatprep.subr.bf16.mxu0 0
    %824 = vmatpush1.bf16.msra.mxu0 %v806
    %825 = vmatprep.subr.bf16.mxu0 0
    %826 = vmatpush1.bf16.msra.mxu0 %v807
    %827 = vmatprep.subr.bf16.mxu0 0
    %828 = vmatpush1.bf16.msra.mxu0 %v808
    %829 = vmatprep.subr.bf16.mxu0 0
    %830 = vmatpush1.bf16.msra.mxu0 %v809
    %831 = vmatprep.subr.bf16.mxu0 0
    %832 = vmatpush1.bf16.msra.mxu0 %v810
    %833 = vmatprep.subr.bf16.mxu0 0
    %834 = vmatpush1.bf16.msra.mxu0 %v811
    %835 = vmatprep.subr.bf16.mxu0 0
    %836 = vmatpush1.bf16.msra.mxu0 %v812
    %837 = vmatprep.subr.bf16.mxu0 0
    %838 = vmatpush1.bf16.msra.mxu0 0
    %839 = vmatprep.subr.bf16.mxu0 0
    %840 = vmatpush1.bf16.msra.mxu0 0
    %841 = vmatprep.subr.bf16.mxu0 0
    %842 = vmatpush1.bf16.msra.mxu0 0
    %843 = vmatprep.subr.bf16.mxu0 0
    %844 = vmatpush1.bf16.msra.mxu0 0
    %845 = vmatprep.subr.bf16.mxu0 0
    %846 = vmatpush1.bf16.msra.mxu0 0
    %847 = vmatprep.subr.bf16.mxu0 0
    %848 = vmatpush1.bf16.msra.mxu0 0
    %849 = vmatprep.subr.bf16.mxu0 0
    %850 = vmatpush1.bf16.msra.mxu0 0
    %851 = vmatprep.subr.bf16.mxu0 0
    %852 = vmatpush1.bf16.msra.mxu0 0
    %853 = vmatprep.mubr.bf16.mxu0 0
    %854 = vmatmul.mubr.bf16.gmra.mrb[0].mxu0 %v751
    %v855 = vpop.f32.mrb[0].mxu0
    %v856 = vadd.f32 %v772, %v855
    %v857 = vpop.f32.mrb[0].mxu0
    %v858 = vpop.f32.mrb[0].mxu0
    %v859 = vadd.f32 %v772, %v858
    %v860 = vpop.f32.mrb[0].mxu0
    %861 = vdwg.mxu0
    %v862 = vadd.f32 %v681, %v856
    %v863 = vadd.f32 %v682, %v859
    %v864 = vld [vmem:[#allocation10 + $0x9] sm:$0x1]
    %v865 = vld [vmem:[#allocation10 + $0xa] sm:$0x1]
    %v866 = vsel %vm174, %v862, 0.0
    %867 = vadd.xlane.f32.xlu0 %v866
    %v868 = vpop.xlane.xlu0 %867
    %v869 = vsel %vm174, %v863, 0.0
    %870 = vadd.xlane.f32.xlu0 %v869
    %v871 = vpop.xlane.xlu0 %870
    %v872 = vmul.f32 %v868, %v603
    %v873 = vmul.f32 %v871, %v603
    %v874 = vsub.f32 %v862, %v872
    %v875 = vsub.f32 %v863, %v873
    %v876 = vmul.f32 %v874, %v874
    %v877 = vmul.f32 %v875, %v875
    %v878 = vsel %vm174, %v876, 0.0
    %879 = vadd.xlane.f32.xlu0 %v878
    %v880 = vpop.xlane.xlu0 %879
    %v881 = vsel %vm174, %v877, 0.0
    %882 = vadd.xlane.f32.xlu0 %v881
    %v883 = vpop.xlane.xlu0 %882
    %v884 = vmul.f32 %v880, %v603
    %v885 = vmul.f32 %v883, %v603
    %v886 = vadd.f32 %v884, 1e-05
    %v887 = vadd.f32 %v885, 1e-05
    %v888 = vrsqrt.pop %v886
    %v889 = vrsqrt.pop %v887
    %v890 = vmul.f32 %v874, %v888
    %v891 = vmul.f32 %v875, %v889
    %v892 = vlaneseq
    %v893 = vshrl.u32 %v892, 7
    %v894 = vsub.s32 0, %v893
    %v895 = vrot.slane %v864, %v894
    %v896 = vmul.f32 %v890, %v895
    %v897 = vmul.f32 %v891, %v895
    %v898 = vlaneseq
    %v899 = vshrl.u32 %v898, 7
    %v900 = vsub.s32 0, %v899
    %v901 = vrot.slane %v865, %v900
    %v902 = vadd.f32 %v896, %v901
    %v903 = vadd.f32 %v897, %v901
    %v904 = vpack.c.bf16 %v903, %v902
    %s905 = scalar_lea.vmem [#allocation6], 16
    %v906 = vld [vmem:[%s905] sm:$0xf]
    %v907 = vld [vmem:[%s905 + $0x4] sm:$0xf]
    %v908 = vld [vmem:[%s905 + $0x8] sm:$0xf]
    %v909 = vld [vmem:[%s905 + $0xc] sm:$0xf]
    %s910 = scalar_lea.vmem [#allocation10], 16
    %v911 = vld [vmem:[%s910] sm:$0x1]
    %v912 = vlaneseq
    %v913 = vshrl.u32 %v912, 7
    %v914 = vsub.s32 0, %v913
    %v915 = vrot.slane %v911, %v914
    %v920 = vunpack.c.l.b16 %v906
    %v921 = vunpack.c.l.b16 %v907
    %v922 = vunpack.c.l.b16 %v908
    %v923 = vunpack.c.l.b16 %v909
    %v924 = vpack.c.b16 %v921, %v920
    %v925 = vpack.c.b16 %v923, %v922
    %v929 = vsel %vm174, %v904, 0
    %931 = vmatprep.subr.bf16.mxu0 0
    %932 = vmatpush1.bf16.msra.mxu0 %v924
    %933 = vmatprep.subr.bf16.mxu0 0
    %934 = vmatpush1.bf16.msra.mxu0 %v925
    %935 = vmatprep.subr.bf16.mxu0 0
    %936 = vmatpush1.bf16.msra.mxu0 0
    %937 = vmatprep.subr.bf16.mxu0 0
    %938 = vmatpush1.bf16.msra.mxu0 0
    %939 = vmatprep.subr.bf16.mxu0 0
    %940 = vmatpush1.bf16.msra.mxu0 0
    %941 = vmatprep.subr.bf16.mxu0 0
    %942 = vmatpush1.bf16.msra.mxu0 0
    %943 = vmatprep.subr.bf16.mxu0 0
    %944 = vmatpush1.bf16.msra.mxu0 0
    %945 = vmatprep.subr.bf16.mxu0 0
    %946 = vmatpush1.bf16.msra.mxu0 0
    %947 = vmatprep.subr.bf16.mxu0 0
    %948 = vmatpush1.bf16.msra.mxu0 0
    %949 = vmatprep.subr.bf16.mxu0 0
    %950 = vmatpush1.bf16.msra.mxu0 0
    %951 = vmatprep.subr.bf16.mxu0 0
    %952 = vmatpush1.bf16.msra.mxu0 0
    %953 = vmatprep.subr.bf16.mxu0 0
    %954 = vmatpush1.bf16.msra.mxu0 0
    %955 = vmatprep.subr.bf16.mxu0 0
    %956 = vmatpush1.bf16.msra.mxu0 0
    %957 = vmatprep.subr.bf16.mxu0 0
    %958 = vmatpush1.bf16.msra.mxu0 0
    %959 = vmatprep.subr.bf16.mxu0 0
    %960 = vmatpush1.bf16.msra.mxu0 0
    %961 = vmatprep.subr.bf16.mxu0 0
    %962 = vmatpush1.bf16.msra.mxu0 0
    %963 = vmatprep.mubr.bf16.mxu0 0
    %964 = vmatmul.mubr.bf16.gmra.mrb[0].mxu0 %v929
    %v965 = vpop.f32.mrb[0].mxu0
    %v966 = vadd.f32 %v915, %v965
    %v967 = vpop.f32.mrb[0].mxu0
    %v968 = vpop.f32.mrb[0].mxu0
    %v969 = vadd.f32 %v915, %v968
    %v970 = vpop.f32.mrb[0].mxu0
    %971 = vdwg.mxu0
    %v972 = vmul.f32 %v966, %v228
    %v973 = vmul.f32 %v969, %v230
    %v974 = vmul.f32 %v966, %v232
    %v975 = vmul.f32 %v969, %v234
    %v976 = vmul.f32 %v966, %v236
    %v977 = vmul.f32 %v969, %v238
    %v978 = vmul.f32 %v966, %v240
    %v979 = vmul.f32 %v969, %v242
    %v980 = vmul.f32 %v966, %v260
    %v981 = vmul.f32 %v969, %v262
    %v982 = vmul.f32 %v966, %v264
    %v983 = vmul.f32 %v969, %v266
    %v984 = vmul.f32 %v966, %v268
    %v985 = vmul.f32 %v969, %v270
    %v986 = vmul.f32 %v966, %v272
    %v987 = vmul.f32 %v969, %v274
    %v988 = vpack.c.bf16 %v969, %v966
    %v989 = vpack.c.bf16 %v973, %v972
    %v990 = vpack.c.bf16 %v975, %v974
    %v991 = vpack.c.bf16 %v977, %v976
    %v992 = vpack.c.bf16 %v979, %v978
    %997 = vrot.lane.b32.xlu0 %v989, 96
    %v998 = vpop.permute.xlu0 %997
    %999 = vrot.lane.b32.xlu0 %v990, 96
    %v1000 = vpop.permute.xlu0 %999
    %1001 = vrot.lane.b32.xlu0 %v991, 96
    %v1002 = vpop.permute.xlu0 %1001
    %1003 = vrot.lane.b32.xlu0 %v992, 96
    %v1004 = vpop.permute.xlu0 %1003
    %v1006 = vsel %vm174, %v988, 0
    %v1009 = vsel %vm174, %v998, 0
    %v1012 = vsel %vm174, %v1000, 0
    %v1015 = vsel %vm174, %v1002, 0
    %v1018 = vsel %vm174, %v1004, 0
    %1020 = vmatprep.subr.bf16.mxu0 0
    %1021 = vmatpush1.bf16.xpose.msra.mxu0 %v1009
    %1022 = vmatprep.subr.bf16.mxu0 0
    %1023 = vmatpush1.bf16.xpose.msra.mxu0 %v1012
    %1024 = vmatprep.subr.bf16.mxu0 0
    %1025 = vmatpush1.bf16.xpose.msra.mxu0 %v1015
    %1026 = vmatprep.subr.bf16.mxu0 0
    %1027 = vmatpush1.bf16.xpose.msra.mxu0 %v1018
    %1028 = vmatprep.subr.bf16.mxu0 0
    %1029 = vmatpush1.bf16.xpose.msra.mxu0 0
    %1030 = vmatprep.subr.bf16.mxu0 0
    %1031 = vmatpush1.bf16.xpose.msra.mxu0 0
    %1032 = vmatprep.subr.bf16.mxu0 0
    %1033 = vmatpush1.bf16.xpose.msra.mxu0 0
    %1034 = vmatprep.subr.bf16.mxu0 0
    %1035 = vmatpush1.bf16.xpose.msra.mxu0 0
    %1036 = vmatprep.subr.bf16.mxu0 0
    %1037 = vmatpush1.bf16.xpose.msra.mxu0 0
    %1038 = vmatprep.subr.bf16.mxu0 0
    %1039 = vmatpush1.bf16.xpose.msra.mxu0 0
    %1040 = vmatprep.subr.bf16.mxu0 0
    %1041 = vmatpush1.bf16.xpose.msra.mxu0 0
    %1042 = vmatprep.subr.bf16.mxu0 0
    %1043 = vmatpush1.bf16.xpose.msra.mxu0 0
    %1044 = vmatprep.subr.bf16.mxu0 0
    %1045 = vmatpush1.bf16.xpose.msra.mxu0 0
    %1046 = vmatprep.subr.bf16.mxu0 0
    %1047 = vmatpush1.bf16.xpose.msra.mxu0 0
    %1048 = vmatprep.subr.bf16.mxu0 0
    %1049 = vmatpush1.bf16.xpose.msra.mxu0 0
    %1050 = vmatprep.subr.bf16.mxu0 0
    %1051 = vmatpush1.bf16.xpose.msra.mxu0 0
    %1052 = vmatprep.mubr.bf16.mxu0 0
    %1053 = vmatmul.mubr.bf16.gmra.mrb[0].mxu0 %v1006
    %v1054 = vpop.f32.mrb[0].mxu0
    %v1055 = vadd.f32 %v134, %v1054
    %v1056 = vpop.f32.mrb[0].mxu0
    %v1057 = vpop.f32.mrb[0].mxu0
    %v1058 = vadd.f32 %v135, %v1057
    %v1059 = vpop.f32.mrb[0].mxu0
    %1060 = vdwg.mxu0
    %v1061 = vsel %vm364, %v1055, -inf
    %1062 = vmax.xlane.f32.xlu0 %v1061
    %v1063 = vpop.xlane.xlu0 %1062
    %v1064 = vsel %vm364, %v1058, -inf
    %1065 = vmax.xlane.f32.xlu0 %v1064
    %v1066 = vpop.xlane.xlu0 %1065
    %v1067 = vsub.f32 %v1055, %v1063
    %v1068 = vsub.f32 %v1058, %v1066
    %v1069 = vmul.f32 %v1067, 1.442695
    %v1070 = vpow.pop %v1069
    %v1071 = vmul.f32 %v1068, 1.442695
    %v1072 = vpow.pop %v1071
    %v1074 = vsel %vm364, %v1070, 0
    %v1077 = vsel %vm364, %v1072, 0
    %1079 = vmatprep.subr.mxu0 0.0
    %1080 = vmatpush1.msra.mxu0 %v144
    %1081 = vmatprep.subr.mxu0 0.0
    %1082 = vmatpush1.msra.mxu0 %v145
    %1083 = vmatprep.subr.mxu0 0.0
    %1084 = vmatpush1.msra.mxu0 %v146
    %1085 = vmatprep.subr.mxu0 0.0
    %1086 = vmatpush1.msra.mxu0 %v147
    %1087 = vmatprep.subr.mxu0 0.0
    %1088 = vmatpush1.msra.mxu0 %v148
    %1089 = vmatprep.subr.mxu0 0.0
    %1090 = vmatpush1.msra.mxu0 %v149
    %1091 = vmatprep.subr.mxu0 0.0
    %1092 = vmatpush1.msra.mxu0 %v150
    %1093 = vmatprep.subr.mxu0 0.0
    %1094 = vmatpush1.msra.mxu0 %v151
    %1095 = vmatprep.subr.mxu0 0.0
    %1096 = vmatpush1.msra.mxu0 0.0
    %1097 = vmatprep.subr.mxu0 0.0
    %1098 = vmatpush1.msra.mxu0 0.0
    %1099 = vmatprep.subr.mxu0 0.0
    %1100 = vmatpush1.msra.mxu0 0.0
    %1101 = vmatprep.subr.mxu0 0.0
    %1102 = vmatpush1.msra.mxu0 0.0
    %1103 = vmatprep.subr.mxu0 0.0
    %1104 = vmatpush1.msra.mxu0 0.0
    %1105 = vmatprep.subr.mxu0 0.0
    %1106 = vmatpush1.msra.mxu0 0.0
    %1107 = vmatprep.subr.mxu0 0.0
    %1108 = vmatpush1.msra.mxu0 0.0
    %1109 = vmatprep.subr.mxu0 0.0
    %1110 = vmatpush1.msra.mxu0 0.0
    %1111 = vmatprep.subr.mxu0 0.0
    %1112 = vmatpush1.msra.mxu0 0.0
    %1113 = vmatprep.subr.mxu0 0.0
    %1114 = vmatpush1.msra.mxu0 0.0
    %1115 = vmatprep.subr.mxu0 0.0
    %1116 = vmatpush1.msra.mxu0 0.0
    %1117 = vmatprep.subr.mxu0 0.0
    %1118 = vmatpush1.msra.mxu0 0.0
    %1119 = vmatprep.subr.mxu0 0.0
    %1120 = vmatpush1.msra.mxu0 0.0
    %1121 = vmatprep.subr.mxu0 0.0
    %1122 = vmatpush1.msra.mxu0 0.0
    %1123 = vmatprep.subr.mxu0 0.0
    %1124 = vmatpush1.msra.mxu0 0.0
    %1125 = vmatprep.subr.mxu0 0.0
    %1126 = vmatpush1.msra.mxu0 0.0
    %1127 = vmatprep.subr.mxu0 0.0
    %1128 = vmatpush1.msra.mxu0 0.0
    %1129 = vmatprep.subr.mxu0 0.0
    %1130 = vmatpush1.msra.mxu0 0.0
    %1131 = vmatprep.subr.mxu0 0.0
    %1132 = vmatpush1.msra.mxu0 0.0
    %1133 = vmatprep.subr.mxu0 0.0
    %1134 = vmatpush1.msra.mxu0 0.0
    %1135 = vmatprep.subr.mxu0 0.0
    %1136 = vmatpush1.msra.mxu0 0.0
    %1137 = vmatprep.subr.mxu0 0.0
    %1138 = vmatpush1.msra.mxu0 0.0
    %1139 = vmatprep.subr.mxu0 0.0
    %1140 = vmatpush1.msra.mxu0 0.0
    %1141 = vmatprep.subr.mxu0 0.0
    %1142 = vmatpush1.msra.mxu0 0.0
    %1143 = vmatprep.mubr.f32.mxu0 0.0
    %1144 = vmatmul.mubr.f32.gmra.mrb[0].mxu0 %v1074
    %v1145 = vpop.f32.mrb[0].mxu0
    %v1146 = vadd.f32 0.0, %v1145
    %v1147 = vpop.f32.mrb[0].mxu0
    %1148 = vmatprep.mubr.f32.mxu0 0.0
    %1149 = vmatmul.mubr.f32.gmra.mrb[0].mxu0 %v1077
    %v1150 = vpop.f32.mrb[0].mxu0
    %v1151 = vadd.f32 0.0, %v1150
    %v1152 = vpop.f32.mrb[0].mxu0
    %1153 = vdwg.mxu0
    %v1154 = vrcp.pop %v1146
    %v1155 = vrcp.pop %v1151
    %v1156 = vmul.f32 %v1070, %v1154
    %v1157 = vmul.f32 %v1072, %v1155
    %v1158 = vpack.c.bf16 %v1157, %v1156
    %v1159 = vpack.c.bf16 %v981, %v980
    %v1160 = vpack.c.bf16 %v983, %v982
    %v1161 = vpack.c.bf16 %v985, %v984
    %v1162 = vpack.c.bf16 %v987, %v986
    %1167 = vrot.lane.b32.xlu0 %v1159, 64
    %v1168 = vpop.permute.xlu0 %1167
    %1169 = vrot.lane.b32.xlu0 %v1160, 64
    %v1170 = vpop.permute.xlu0 %1169
    %1171 = vrot.lane.b32.xlu0 %v1161, 64
    %v1172 = vpop.permute.xlu0 %1171
    %1173 = vrot.lane.b32.xlu0 %v1162, 64
    %v1174 = vpop.permute.xlu0 %1173
    %v1180 = vsel %vm364, %v1158, 0
    %1182 = vmatprep.subr.bf16.mxu0 0
    %1183 = vmatpush1.bf16.msra.mxu0 %v1168
    %1184 = vmatprep.subr.bf16.mxu0 0
    %1185 = vmatpush1.bf16.msra.mxu0 %v1170
    %1186 = vmatprep.subr.bf16.mxu0 0
    %1187 = vmatpush1.bf16.msra.mxu0 %v1172
    %1188 = vmatprep.subr.bf16.mxu0 0
    %1189 = vmatpush1.bf16.msra.mxu0 %v1174
    %1190 = vmatprep.subr.bf16.mxu0 0
    %1191 = vmatpush1.bf16.msra.mxu0 0
    %1192 = vmatprep.subr.bf16.mxu0 0
    %1193 = vmatpush1.bf16.msra.mxu0 0
    %1194 = vmatprep.subr.bf16.mxu0 0
    %1195 = vmatpush1.bf16.msra.mxu0 0
    %1196 = vmatprep.subr.bf16.mxu0 0
    %1197 = vmatpush1.bf16.msra.mxu0 0
    %1198 = vmatprep.subr.bf16.mxu0 0
    %1199 = vmatpush1.bf16.msra.mxu0 0
    %1200 = vmatprep.subr.bf16.mxu0 0
    %1201 = vmatpush1.bf16.msra.mxu0 0
    %1202 = vmatprep.subr.bf16.mxu0 0
    %1203 = vmatpush1.bf16.msra.mxu0 0
    %1204 = vmatprep.subr.bf16.mxu0 0
    %1205 = vmatpush1.bf16.msra.mxu0 0
    %1206 = vmatprep.subr.bf16.mxu0 0
    %1207 = vmatpush1.bf16.msra.mxu0 0
    %1208 = vmatprep.subr.bf16.mxu0 0
    %1209 = vmatpush1.bf16.msra.mxu0 0
    %1210 = vmatprep.subr.bf16.mxu0 0
    %1211 = vmatpush1.bf16.msra.mxu0 0
    %1212 = vmatprep.subr.bf16.mxu0 0
    %1213 = vmatpush1.bf16.msra.mxu0 0
    %1214 = vmatprep.mubr.bf16.mxu0 0
    %1215 = vmatmul.mubr.bf16.gmra.mrb[0].mxu0 %v1180
    %v1216 = vpop.f32.mrb[0].mxu0
    %v1217 = vadd.f32 0.0, %v1216
    %v1218 = vpop.f32.mrb[0].mxu0
    %v1219 = vpop.f32.mrb[0].mxu0
    %v1220 = vadd.f32 0.0, %v1219
    %v1221 = vpop.f32.mrb[0].mxu0
    %1222 = vdwg.mxu0
    %v1223 = vpack.c.bf16 %v1220, %v1217
    %s1224 = scalar_lea.vmem [#allocation7], 16
    %v1225 = vld [vmem:[%s1224] sm:$0xf]
    %v1226 = vld [vmem:[%s1224 + $0x4] sm:$0xf]
    %v1227 = vld [vmem:[%s1224 + $0x8] sm:$0xf]
    %v1228 = vld [vmem:[%s1224 + $0xc] sm:$0xf]
    %v1229 = vld [vmem:[%s910 + $0x1] sm:$0x1]
    %v1230 = vlaneseq
    %v1231 = vshrl.u32 %v1230, 7
    %v1232 = vsub.s32 0, %v1231
    %v1233 = vrot.slane %v1229, %v1232
    %v1238 = vunpack.c.l.b16 %v1225
    %v1239 = vunpack.c.l.b16 %v1226
    %v1240 = vunpack.c.l.b16 %v1227
    %v1241 = vunpack.c.l.b16 %v1228
    %v1242 = vpack.c.b16 %v1239, %v1238
    %v1243 = vpack.c.b16 %v1241, %v1240
    %v1247 = vsel %vm174, %v1223, 0
    %1249 = vmatprep.subr.bf16.mxu0 0
    %1250 = vmatpush1.bf16.msra.mxu0 %v1242
    %1251 = vmatprep.subr.bf16.mxu0 0
    %1252 = vmatpush1.bf16.msra.mxu0 %v1243
    %1253 = vmatprep.subr.bf16.mxu0 0
    %1254 = vmatpush1.bf16.msra.mxu0 0
    %1255 = vmatprep.subr.bf16.mxu0 0
    %1256 = vmatpush1.bf16.msra.mxu0 0
    %1257 = vmatprep.subr.bf16.mxu0 0
    %1258 = vmatpush1.bf16.msra.mxu0 0
    %1259 = vmatprep.subr.bf16.mxu0 0
    %1260 = vmatpush1.bf16.msra.mxu0 0
    %1261 = vmatprep.subr.bf16.mxu0 0
    %1262 = vmatpush1.bf16.msra.mxu0 0
    %1263 = vmatprep.subr.bf16.mxu0 0
    %1264 = vmatpush1.bf16.msra.mxu0 0
    %1265 = vmatprep.subr.bf16.mxu0 0
    %1266 = vmatpush1.bf16.msra.mxu0 0
    %1267 = vmatprep.subr.bf16.mxu0 0
    %1268 = vmatpush1.bf16.msra.mxu0 0
    %1269 = vmatprep.subr.bf16.mxu0 0
    %1270 = vmatpush1.bf16.msra.mxu0 0
    %1271 = vmatprep.subr.bf16.mxu0 0
    %1272 = vmatpush1.bf16.msra.mxu0 0
    %1273 = vmatprep.subr.bf16.mxu0 0
    %1274 = vmatpush1.bf16.msra.mxu0 0
    %1275 = vmatprep.subr.bf16.mxu0 0
    %1276 = vmatpush1.bf16.msra.mxu0 0
    %1277 = vmatprep.subr.bf16.mxu0 0
    %1278 = vmatpush1.bf16.msra.mxu0 0
    %1279 = vmatprep.subr.bf16.mxu0 0
    %1280 = vmatpush1.bf16.msra.mxu0 0
    %1281 = vmatprep.mubr.bf16.mxu0 0
    %1282 = vmatmul.mubr.bf16.gmra.mrb[0].mxu0 %v1247
    %v1283 = vpop.f32.mrb[0].mxu0
    %v1284 = vadd.f32 %v1233, %v1283
    %v1285 = vpop.f32.mrb[0].mxu0
    %v1286 = vpop.f32.mrb[0].mxu0
    %v1287 = vadd.f32 %v1233, %v1286
    %v1288 = vpop.f32.mrb[0].mxu0
    %1289 = vdwg.mxu0
    %v1290 = vadd.f32 %v902, %v1284
    %v1291 = vadd.f32 %v903, %v1287
    %v1292 = vld [vmem:[%s910 + $0x5] sm:$0x1]
    %v1293 = vld [vmem:[%s910 + $0x6] sm:$0x1]
    %v1294 = vsel %vm174, %v1290, 0.0
    %1295 = vadd.xlane.f32.xlu0 %v1294
    %v1296 = vpop.xlane.xlu0 %1295
    %v1297 = vsel %vm174, %v1291, 0.0
    %1298 = vadd.xlane.f32.xlu0 %v1297
    %v1299 = vpop.xlane.xlu0 %1298
    %v1300 = vmul.f32 %v1296, %v603
    %v1301 = vmul.f32 %v1299, %v603
    %v1302 = vsub.f32 %v1290, %v1300
    %v1303 = vsub.f32 %v1291, %v1301
    %v1304 = vmul.f32 %v1302, %v1302
    %v1305 = vmul.f32 %v1303, %v1303
    %v1306 = vsel %vm174, %v1304, 0.0
    %1307 = vadd.xlane.f32.xlu0 %v1306
    %v1308 = vpop.xlane.xlu0 %1307
    %v1309 = vsel %vm174, %v1305, 0.0
    %1310 = vadd.xlane.f32.xlu0 %v1309
    %v1311 = vpop.xlane.xlu0 %1310
    %v1312 = vmul.f32 %v1308, %v603
    %v1313 = vmul.f32 %v1311, %v603
    %v1314 = vadd.f32 %v1312, 1e-05
    %v1315 = vadd.f32 %v1313, 1e-05
    %v1316 = vrsqrt.pop %v1314
    %v1317 = vrsqrt.pop %v1315
    %v1318 = vmul.f32 %v1302, %v1316
    %v1319 = vmul.f32 %v1303, %v1317
    %v1320 = vlaneseq
    %v1321 = vshrl.u32 %v1320, 7
    %v1322 = vsub.s32 0, %v1321
    %v1323 = vrot.slane %v1292, %v1322
    %v1324 = vmul.f32 %v1318, %v1323
    %v1325 = vmul.f32 %v1319, %v1323
    %v1326 = vlaneseq
    %v1327 = vshrl.u32 %v1326, 7
    %v1328 = vsub.s32 0, %v1327
    %v1329 = vrot.slane %v1293, %v1328
    %v1330 = vadd.f32 %v1324, %v1329
    %v1331 = vadd.f32 %v1325, %v1329
    %v1332 = vld [vmem:[%s910 + $0x2] sm:$0x1]
    %v1333 = vlaneseq
    %v1334 = vshrl.u32 %v1333, 7
    %v1335 = vsub.s32 0, %v1334
    %v1336 = vrot.slane %v1332, %v1335
    %v1337 = vadd.f32 %v1330, %v1336
    %v1338 = vadd.f32 %v1331, %v1336
    %v1339 = vld [vmem:[%s910 + $0x7] sm:$0x1]
    %v1340 = vld [vmem:[%s910 + $0x8] sm:$0x1]
    %v1341 = vsel %vm174, %v1337, 0.0
    %1342 = vadd.xlane.f32.xlu0 %v1341
    %v1343 = vpop.xlane.xlu0 %1342
    %v1344 = vsel %vm174, %v1338, 0.0
    %1345 = vadd.xlane.f32.xlu0 %v1344
    %v1346 = vpop.xlane.xlu0 %1345
    %v1347 = vmul.f32 %v1343, %v603
    %v1348 = vmul.f32 %v1346, %v603
    %v1349 = vsub.f32 %v1337, %v1347
    %v1350 = vsub.f32 %v1338, %v1348
    %v1351 = vmul.f32 %v1349, %v1349
    %v1352 = vmul.f32 %v1350, %v1350
    %v1353 = vsel %vm174, %v1351, 0.0
    %1354 = vadd.xlane.f32.xlu0 %v1353
    %v1355 = vpop.xlane.xlu0 %1354
    %v1356 = vsel %vm174, %v1352, 0.0
    %1357 = vadd.xlane.f32.xlu0 %v1356
    %v1358 = vpop.xlane.xlu0 %1357
    %v1359 = vmul.f32 %v1355, %v603
    %v1360 = vmul.f32 %v1358, %v603
    %v1361 = vadd.f32 %v1359, 1e-05
    %v1362 = vadd.f32 %v1360, 1e-05
    %v1363 = vrsqrt.pop %v1361
    %v1364 = vrsqrt.pop %v1362
    %v1365 = vmul.f32 %v1349, %v1363
    %v1366 = vmul.f32 %v1350, %v1364
    %v1367 = vlaneseq
    %v1368 = vshrl.u32 %v1367, 7
    %v1369 = vsub.s32 0, %v1368
    %v1370 = vrot.slane %v1339, %v1369
    %v1371 = vmul.f32 %v1365, %v1370
    %v1372 = vmul.f32 %v1366, %v1370
    %v1373 = vlaneseq
    %v1374 = vshrl.u32 %v1373, 7
    %v1375 = vsub.s32 0, %v1374
    %v1376 = vrot.slane %v1340, %v1375
    %v1377 = vadd.f32 %v1371, %v1376
    %v1378 = vadd.f32 %v1372, %v1376
    %v1379 = vpack.c.bf16 %v1378, %v1377
    %s1380 = scalar_lea.vmem [#allocation9], 16
    %v1381 = vld [vmem:[%s1380] sm:$0xf]
    %v1382 = vld [vmem:[%s1380 + $0x4] sm:$0xf]
    %v1383 = vld [vmem:[%s1380 + $0x8] sm:$0xf]
    %v1384 = vld [vmem:[%s1380 + $0xc] sm:$0xf]
    %v1385 = vld [vmem:[%s910 + $0x3] sm:$0x1]
    %v1386 = vlaneseq
    %v1387 = vshrl.u32 %v1386, 7
    %v1388 = vsub.s32 0, %v1387
    %v1389 = vrot.slane %v1385, %v1388
    %v1394 = vunpack.c.l.b16 %v1381
    %v1395 = vunpack.c.l.b16 %v1382
    %v1396 = vunpack.c.l.b16 %v1383
    %v1397 = vunpack.c.l.b16 %v1384
    %v1398 = vpack.c.b16 %v1395, %v1394
    %v1399 = vpack.c.b16 %v1397, %v1396
    %v1403 = vsel %vm174, %v1379, 0
    %1405 = vmatprep.subr.bf16.mxu0 0
    %1406 = vmatpush1.bf16.msra.mxu0 %v1398
    %1407 = vmatprep.subr.bf16.mxu0 0
    %1408 = vmatpush1.bf16.msra.mxu0 %v1399
    %1409 = vmatprep.subr.bf16.mxu0 0
    %1410 = vmatpush1.bf16.msra.mxu0 0
    %1411 = vmatprep.subr.bf16.mxu0 0
    %1412 = vmatpush1.bf16.msra.mxu0 0
    %1413 = vmatprep.subr.bf16.mxu0 0
    %1414 = vmatpush1.bf16.msra.mxu0 0
    %1415 = vmatprep.subr.bf16.mxu0 0
    %1416 = vmatpush1.bf16.msra.mxu0 0
    %1417 = vmatprep.subr.bf16.mxu0 0
    %1418 = vmatpush1.bf16.msra.mxu0 0
    %1419 = vmatprep.subr.bf16.mxu0 0
    %1420 = vmatpush1.bf16.msra.mxu0 0
    %1421 = vmatprep.subr.bf16.mxu0 0
    %1422 = vmatpush1.bf16.msra.mxu0 0
    %1423 = vmatprep.subr.bf16.mxu0 0
    %1424 = vmatpush1.bf16.msra.mxu0 0
    %1425 = vmatprep.subr.bf16.mxu0 0
    %1426 = vmatpush1.bf16.msra.mxu0 0
    %1427 = vmatprep.subr.bf16.mxu0 0
    %1428 = vmatpush1.bf16.msra.mxu0 0
    %1429 = vmatprep.subr.bf16.mxu0 0
    %1430 = vmatpush1.bf16.msra.mxu0 0
    %1431 = vmatprep.subr.bf16.mxu0 0
    %1432 = vmatpush1.bf16.msra.mxu0 0
    %1433 = vmatprep.subr.bf16.mxu0 0
    %1434 = vmatpush1.bf16.msra.mxu0 0
    %1435 = vmatprep.subr.bf16.mxu0 0
    %1436 = vmatpush1.bf16.msra.mxu0 0
    %1437 = vmatprep.mubr.bf16.mxu0 0
    %1438 = vmatmul.mubr.bf16.gmra.mrb[0].mxu0 %v1403
    %v1439 = vpop.f32.mrb[0].mxu0
    %v1440 = vadd.f32 %v1389, %v1439
    %v1441 = vpop.f32.mrb[0].mxu0
    %v1442 = vpop.f32.mrb[0].mxu0
    %v1443 = vadd.f32 %v1389, %v1442
    %v1444 = vpop.f32.mrb[0].mxu0
    %1445 = vdwg.mxu0
    %v1446 = vmax.f32 %v1440, 0.0
    %v1447 = vmax.f32 %v1443, 0.0
    %v1448 = vpack.c.bf16 %v1447, %v1446
    %s1449 = scalar_lea.vmem %s7, 64
    %v1450 = vld [vmem:[%s1449] sm:$0xf]
    %v1451 = vld [vmem:[%s1449 + $0x4] sm:$0xf]
    %v1452 = vld [vmem:[%s1449 + $0x8] sm:$0xf]
    %v1453 = vld [vmem:[%s1449 + $0xc] sm:$0xf]
    %v1454 = vld [vmem:[%s1449 + $0x10] sm:$0xf]
    %v1455 = vld [vmem:[%s1449 + $0x14] sm:$0xf]
    %v1456 = vld [vmem:[%s1449 + $0x18] sm:$0xf]
    %v1457 = vld [vmem:[%s1449 + $0x1c] sm:$0xf]
    %v1458 = vld [vmem:[%s1449 + $0x20] sm:$0xf]
    %v1459 = vld [vmem:[%s1449 + $0x24] sm:$0xf]
    %v1460 = vld [vmem:[%s1449 + $0x28] sm:$0xf]
    %v1461 = vld [vmem:[%s1449 + $0x2c] sm:$0xf]
    %v1462 = vld [vmem:[%s1449 + $0x30] sm:$0xf]
    %v1463 = vld [vmem:[%s1449 + $0x34] sm:$0xf]
    %v1464 = vld [vmem:[%s1449 + $0x38] sm:$0xf]
    %v1465 = vld [vmem:[%s1449 + $0x3c] sm:$0xf]
    %v1466 = vld [vmem:[%s910 + $0x4] sm:$0x1]
    %v1467 = vlaneseq
    %v1468 = vshrl.u32 %v1467, 7
    %v1469 = vsub.s32 0, %v1468
    %v1470 = vrot.slane %v1466, %v1469
    %v1487 = vunpack.c.l.b16 %v1450
    %v1488 = vunpack.c.l.b16 %v1451
    %v1489 = vunpack.c.l.b16 %v1452
    %v1490 = vunpack.c.l.b16 %v1453
    %v1491 = vunpack.c.l.b16 %v1454
    %v1492 = vunpack.c.l.b16 %v1455
    %v1493 = vunpack.c.l.b16 %v1456
    %v1494 = vunpack.c.l.b16 %v1457
    %v1495 = vunpack.c.l.b16 %v1458
    %v1496 = vunpack.c.l.b16 %v1459
    %v1497 = vunpack.c.l.b16 %v1460
    %v1498 = vunpack.c.l.b16 %v1461
    %v1499 = vunpack.c.l.b16 %v1462
    %v1500 = vunpack.c.l.b16 %v1463
    %v1501 = vunpack.c.l.b16 %v1464
    %v1502 = vunpack.c.l.b16 %v1465
    %v1503 = vpack.c.b16 %v1488, %v1487
    %v1504 = vpack.c.b16 %v1490, %v1489
    %v1505 = vpack.c.b16 %v1492, %v1491
    %v1506 = vpack.c.b16 %v1494, %v1493
    %v1507 = vpack.c.b16 %v1496, %v1495
    %v1508 = vpack.c.b16 %v1498, %v1497
    %v1509 = vpack.c.b16 %v1500, %v1499
    %v1510 = vpack.c.b16 %v1502, %v1501
    %1519 = vmatprep.subr.bf16.mxu0 0
    %1520 = vmatpush1.bf16.msra.mxu0 %v1503
    %1521 = vmatprep.subr.bf16.mxu0 0
    %1522 = vmatpush1.bf16.msra.mxu0 %v1504
    %1523 = vmatprep.subr.bf16.mxu0 0
    %1524 = vmatpush1.bf16.msra.mxu0 %v1505
    %1525 = vmatprep.subr.bf16.mxu0 0
    %1526 = vmatpush1.bf16.msra.mxu0 %v1506
    %1527 = vmatprep.subr.bf16.mxu0 0
    %1528 = vmatpush1.bf16.msra.mxu0 %v1507
    %1529 = vmatprep.subr.bf16.mxu0 0
    %1530 = vmatpush1.bf16.msra.mxu0 %v1508
    %1531 = vmatprep.subr.bf16.mxu0 0
    %1532 = vmatpush1.bf16.msra.mxu0 %v1509
    %1533 = vmatprep.subr.bf16.mxu0 0
    %1534 = vmatpush1.bf16.msra.mxu0 %v1510
    %1535 = vmatprep.subr.bf16.mxu0 0
    %1536 = vmatpush1.bf16.msra.mxu0 0
    %1537 = vmatprep.subr.bf16.mxu0 0
    %1538 = vmatpush1.bf16.msra.mxu0 0
    %1539 = vmatprep.subr.bf16.mxu0 0
    %1540 = vmatpush1.bf16.msra.mxu0 0
    %1541 = vmatprep.subr.bf16.mxu0 0
    %1542 = vmatpush1.bf16.msra.mxu0 0
    %1543 = vmatprep.subr.bf16.mxu0 0
    %1544 = vmatpush1.bf16.msra.mxu0 0
    %1545 = vmatprep.subr.bf16.mxu0 0
    %1546 = vmatpush1.bf16.msra.mxu0 0
    %1547 = vmatprep.subr.bf16.mxu0 0
    %1548 = vmatpush1.bf16.msra.mxu0 0
    %1549 = vmatprep.subr.bf16.mxu0 0
    %1550 = vmatpush1.bf16.msra.mxu0 0
    %1551 = vmatprep.mubr.bf16.mxu0 0
    %1552 = vmatmul.mubr.bf16.gmra.mrb[0].mxu0 %v1448
    %v1553 = vpop.f32.mrb[0].mxu0
    %v1554 = vadd.f32 %v1470, %v1553
    %v1555 = vpop.f32.mrb[0].mxu0
    %v1556 = vpop.f32.mrb[0].mxu0
    %v1557 = vadd.f32 %v1470, %v1556
    %v1558 = vpop.f32.mrb[0].mxu0
    %1559 = vdwg.mxu0
    %v1560 = vadd.f32 %v1377, %v1554
    %v1561 = vadd.f32 %v1378, %v1557
    %v1562 = vld [vmem:[%s910 + $0x9] sm:$0x1]
    %v1563 = vld [vmem:[%s910 + $0xa] sm:$0x1]
    %v1564 = vsel %vm174, %v1560, 0.0
    %1565 = vadd.xlane.f32.xlu0 %v1564
    %v1566 = vpop.xlane.xlu0 %1565
    %v1567 = vsel %vm174, %v1561, 0.0
    %1568 = vadd.xlane.f32.xlu0 %v1567
    %v1569 = vpop.xlane.xlu0 %1568
    %v1570 = vmul.f32 %v1566, %v603
    %v1571 = vmul.f32 %v1569, %v603
    %v1572 = vsub.f32 %v1560, %v1570
    %v1573 = vsub.f32 %v1561, %v1571
    %v1574 = vmul.f32 %v1572, %v1572
    %v1575 = vmul.f32 %v1573, %v1573
    %v1576 = vsel %vm174, %v1574, 0.0
    %1577 = vadd.xlane.f32.xlu0 %v1576
    %v1578 = vpop.xlane.xlu0 %1577
    %v1579 = vsel %vm174, %v1575, 0.0
    %1580 = vadd.xlane.f32.xlu0 %v1579
    %v1581 = vpop.xlane.xlu0 %1580
    %v1582 = vmul.f32 %v1578, %v603
    %v1583 = vmul.f32 %v1581, %v603
    %v1584 = vadd.f32 %v1582, 1e-05
    %v1585 = vadd.f32 %v1583, 1e-05
    %v1586 = vrsqrt.pop %v1584
    %v1587 = vrsqrt.pop %v1585
    %v1588 = vmul.f32 %v1572, %v1586
    %v1589 = vmul.f32 %v1573, %v1587
    %v1590 = vlaneseq
    %v1591 = vshrl.u32 %v1590, 7
    %v1592 = vsub.s32 0, %v1591
    %v1593 = vrot.slane %v1562, %v1592
    %v1594 = vmul.f32 %v1588, %v1593
    %v1595 = vmul.f32 %v1589, %v1593
    %v1596 = vlaneseq
    %v1597 = vshrl.u32 %v1596, 7
    %v1598 = vsub.s32 0, %v1597
    %v1599 = vrot.slane %v1563, %v1598
    %v1600 = vadd.f32 %v1594, %v1599
    %v1601 = vadd.f32 %v1595, %v1599
    %v1602 = vld [vmem:[#allocation12] sm:$0x1]
    %v1603 = vld [vmem:[#allocation12 + $0x1] sm:$0x1]
    %v1604 = vsel %vm174, %v1600, 0.0
    %1605 = vadd.xlane.f32.xlu0 %v1604
    %v1606 = vpop.xlane.xlu0 %1605
    %v1607 = vsel %vm174, %v1601, 0.0
    %1608 = vadd.xlane.f32.xlu0 %v1607
    %v1609 = vpop.xlane.xlu0 %1608
    %v1610 = vmul.f32 %v1606, %v603
    %v1611 = vmul.f32 %v1609, %v603
    %v1612 = vsub.f32 %v1600, %v1610
    %v1613 = vsub.f32 %v1601, %v1611
    %v1614 = vmul.f32 %v1612, %v1612
    %v1615 = vmul.f32 %v1613, %v1613
    %v1616 = vsel %vm174, %v1614, 0.0
    %1617 = vadd.xlane.f32.xlu0 %v1616
    %v1618 = vpop.xlane.xlu0 %1617
    %v1619 = vsel %vm174, %v1615, 0.0
    %1620 = vadd.xlane.f32.xlu0 %v1619
    %v1621 = vpop.xlane.xlu0 %1620
    %v1622 = vmul.f32 %v1618, %v603
    %v1623 = vmul.f32 %v1621, %v603
    %v1624 = vadd.f32 %v1622, 1e-05
    %v1625 = vadd.f32 %v1623, 1e-05
    %v1626 = vrsqrt.pop %v1624
    %v1627 = vrsqrt.pop %v1625
    %v1628 = vmul.f32 %v1612, %v1626
    %v1629 = vmul.f32 %v1613, %v1627
    %v1630 = vlaneseq
    %v1631 = vshrl.u32 %v1630, 7
    %v1632 = vsub.s32 0, %v1631
    %v1633 = vrot.slane %v1602, %v1632
    %v1634 = vmul.f32 %v1628, %v1633
    %v1635 = vmul.f32 %v1629, %v1633
    %v1636 = vlaneseq
    %v1637 = vshrl.u32 %v1636, 7
    %v1638 = vsub.s32 0, %v1637
    %v1639 = vrot.slane %v1603, %v1638
    %v1640 = vadd.f32 %v1634, %v1639
    %v1641 = vadd.f32 %v1635, %v1639
    %v1642 = vpack.c.bf16 %v1641, %v1640
    %v1643 = vld [vmem:[%s9] sm:$0xf]
    %v1644 = vld [vmem:[%s9 + $0x4] sm:$0xf]
    %v1645 = vld [vmem:[%s9 + $0x8] sm:$0xf]
    %v1646 = vld [vmem:[%s9 + $0xc] sm:$0xf]
    %v1647 = vld [vmem:[#allocation12 + $0x2] sm:$0x1]
    %v1648 = vlaneseq
    %v1649 = vshrl.u32 %v1648, 7
    %v1650 = vsub.s32 0, %v1649
    %v1651 = vrot.slane %v1647, %v1650
    %v1656 = vunpack.c.l.b16 %v1643
    %v1657 = vunpack.c.l.b16 %v1644
    %v1658 = vunpack.c.l.b16 %v1645
    %v1659 = vunpack.c.l.b16 %v1646
    %v1660 = vpack.c.b16 %v1657, %v1656
    %v1661 = vpack.c.b16 %v1659, %v1658
    %v1665 = vsel %vm174, %v1642, 0
    %1667 = vmatprep.subr.bf16.mxu0 0
    %1668 = vmatpush1.bf16.msra.mxu0 %v1660
    %1669 = vmatprep.subr.bf16.mxu0 0
    %1670 = vmatpush1.bf16.msra.mxu0 %v1661
    %1671 = vmatprep.subr.bf16.mxu0 0
    %1672 = vmatpush1.bf16.msra.mxu0 0
    %1673 = vmatprep.subr.bf16.mxu0 0
    %1674 = vmatpush1.bf16.msra.mxu0 0
    %1675 = vmatprep.subr.bf16.mxu0 0
    %1676 = vmatpush1.bf16.msra.mxu0 0
    %1677 = vmatprep.subr.bf16.mxu0 0
    %1678 = vmatpush1.bf16.msra.mxu0 0
    %1679 = vmatprep.subr.bf16.mxu0 0
    %1680 = vmatpush1.bf16.msra.mxu0 0
    %1681 = vmatprep.subr.bf16.mxu0 0
    %1682 = vmatpush1.bf16.msra.mxu0 0
    %1683 = vmatprep.subr.bf16.mxu0 0
    %1684 = vmatpush1.bf16.msra.mxu0 0
    %1685 = vmatprep.subr.bf16.mxu0 0
    %1686 = vmatpush1.bf16.msra.mxu0 0
    %1687 = vmatprep.subr.bf16.mxu0 0
    %1688 = vmatpush1.bf16.msra.mxu0 0
    %1689 = vmatprep.subr.bf16.mxu0 0
    %1690 = vmatpush1.bf16.msra.mxu0 0
    %1691 = vmatprep.subr.bf16.mxu0 0
    %1692 = vmatpush1.bf16.msra.mxu0 0
    %1693 = vmatprep.subr.bf16.mxu0 0
    %1694 = vmatpush1.bf16.msra.mxu0 0
    %1695 = vmatprep.subr.bf16.mxu0 0
    %1696 = vmatpush1.bf16.msra.mxu0 0
    %1697 = vmatprep.subr.bf16.mxu0 0
    %1698 = vmatpush1.bf16.msra.mxu0 0
    %1699 = vmatprep.mubr.bf16.mxu0 0
    %1700 = vmatmul.mubr.bf16.gmra.mrb[0].mxu0 %v1665
    %v1701 = vpop.f32.mrb[0].mxu0
    %v1702 = vadd.f32 %v1651, %v1701
    %v1703 = vpop.f32.mrb[0].mxu0
    %v1704 = vpop.f32.mrb[0].mxu0
    %v1705 = vadd.f32 %v1651, %v1704
    %v1706 = vpop.f32.mrb[0].mxu0
    %1707 = vdwg.mxu0
    %1708 = vst [vmem:[%s11] sm:$0xff] %v1702
    %1709 = vst [vmem:[%s11 + $0x8] sm:$0xff] %v1705
    // Predicated region
    $region74: #{forward.1} parent=1 // pred_check
      _
    $region75: #{forward.1} parent=1 // pred_check_branch
      %1711 = sbr.rel (0) target = $region77
    $region76: #{forward.1} parent=1 // pred_region
      _
    $region77: #{forward.1} parent=1 // pred_fallthru
      _
    // Predicated region
    $region78: #{forward.1} parent=1 // pred_check
      _
    $region79: #{forward.1} parent=1 // pred_check_branch
      %1713 = sbr.rel (0) target = $region81
    $region80: #{forward.1} parent=1 // pred_region
      _
    $region81: #{forward.1} parent=1 // pred_fallthru
      _
    %1714 = vsyncpa [#allocation3], 1
    %1715 = vsyncpa [#allocation5], 1
    %1716 = vsyncpa [#allocation8], 1
    %1717 = vsyncpa [#allocation11], 1

</llo_original>
